<compile_context>
chip_gen: v7x
topology: tpu7x:2x2x1
jax: 0.10.0
libtpu: 0.0.40
codegen_flags: <defaults>
</compile_context>

<pallas_src>
import functools

import jax
import jax.numpy as jnp
from jax.experimental import pallas as pl
from jax.experimental.pallas import tpu as pltpu


# ---------------------------------------------------------------------------
# Helpers
# ---------------------------------------------------------------------------
def _vmem_limit_bytes():
    """Scoped-VMEM cap: ~3/4 of physical (≈96MiB v5e/v6e, ≈48MiB v7x)."""
    try:
        cap = pltpu.get_tpu_info().vmem_capacity_bytes
        return int(min(96 * 1024 * 1024, cap * 3 // 4))
    except Exception:  # pragma: no cover - conservative fallback
        return 48 * 1024 * 1024


def _pick_batch_block(batch):
    """Images per grid step: batch enough to feed the MXU (large M for the
    pointwise/head matmuls, big per-step DMAs) while keeping >= 2 grid steps
    so both v7x TensorCores get work through the 'parallel' axis."""
    for bb in (16, 8, 4, 2):
        if batch % bb == 0 and batch // bb >= 2:
            return bb
    return 1


def _pack_stem_weights(stem_w):
    """Regroup (3,3,Cin,Cout) stride-2 conv weights into 4 shift-grouped
    (4*Cin, Cout) matrices matching the space-to-depth input layout so that
    the stem becomes 4 shifted accumulated matmuls inside the kernel."""
    kh_n, kw_n, cin, cout = stem_w.shape
    w4 = jnp.zeros((4, 4 * cin, cout), stem_w.dtype)
    for di in range(2):
        for dj in range(2):
            s = di * 2 + dj
            for a in range(2):
                for b in range(2):
                    kh, kw = 2 * di + a, 2 * dj + b
                    if kh < kh_n and kw < kw_n:
                        c0 = (a * 2 + b) * cin
                        w4 = w4.at[s, c0:c0 + cin, :].set(stem_w[kh, kw])
    return w4


# ---------------------------------------------------------------------------
# Single fused kernel: stem conv -> depthwise+SE+pointwise+head -> pool -> FC.
# Gridded over batch tiles; all intermediates stay in VMEM.
# ---------------------------------------------------------------------------
def _encoder_kernel(xs_ref, w4_ref, stem_b_ref, dw_w_ref,
                    se_w1_ref, se_b1_ref, se_w2_ref, se_b2_ref,
                    pw_w_ref, pw_b_ref, head_w_ref, head_b_ref,
                    fc_w_ref, fc_b_ref, o_ref, xpad_ref, *, Bb, Ho, Wo):
    HW = Ho * Wo
    M = Bb * HW
    Cs = stem_b_ref.shape[-1]       # stem / block channels (128, lane dense)
    Ch = head_b_ref.shape[-1]       # head channels (128, lane dense)
    C4 = xs_ref.shape[-1]           # 4 * Cin of the space-to-depth input

    # ---- stem: 3x3 stride-2 conv (+bias, swish) as 4 shifted matmuls over
    #      the space-to-depth, 1-padded input (no im2col HBM expansion). ----
    acc = jnp.zeros((M, Cs), jnp.float32)
    for s in range(4):
        di, dj = s // 2, s % 2
        tap = xs_ref[:, di:di + Ho, dj:dj + Wo, :]          # (Bb,Ho,Wo,4*Cin)
        acc = acc + jnp.dot(tap.reshape(M, C4).astype(jnp.bfloat16),
                            w4_ref[s], preferred_element_type=jnp.float32)
    y = acc + stem_b_ref[...]
    y = y * jax.nn.sigmoid(y)                               # swish, (M, Cs)

    # ---- depthwise 3x3 stride-1 + swish; zero-pad in a VMEM scratch.
    #      Only the 1-wide halo strips are zeroed (interior is overwritten).
    #      Done every step: under 'parallel' sharding each core owns its own
    #      scratch, so a program_id==0 one-time init would be unsafe. ----
    zrow = jnp.zeros((Bb, 1, Wo + 2, Cs), jnp.float32)
    xpad_ref[:, 0:1, 0:Wo + 2, :] = zrow
    xpad_ref[:, Ho + 1:Ho + 2, 0:Wo + 2, :] = zrow
    zcol = jnp.zeros((Bb, Ho, 1, Cs), jnp.float32)
    xpad_ref[:, 1:1 + Ho, 0:1, :] = zcol
    xpad_ref[:, 1:1 + Ho, Wo + 1:Wo + 2, :] = zcol
    xpad_ref[:, 1:1 + Ho, 1:1 + Wo, :] = y.reshape(Bb, Ho, Wo, Cs)

    acc_dw = jnp.zeros((Bb, Ho, Wo, Cs), jnp.float32)
    for kh in range(3):
        for kw in range(3):
            acc_dw = acc_dw + (xpad_ref[:, kh:kh + Ho, kw:kw + Wo, :]
                               * dw_w_ref[kh, kw, :])
    yd = acc_dw * jax.nn.sigmoid(acc_dw)                    # (Bb,Ho,Wo,Cs)

    # ---- squeeze-and-excite (per-image spatial mean -> FC -> FC -> gate) ----
    y3 = yd.reshape(Bb, HW, Cs)
    sm = jnp.mean(y3, axis=1)                               # (Bb, Cs)
    h = jnp.dot(sm.astype(jnp.bfloat16), se_w1_ref[...],
                preferred_element_type=jnp.float32) + se_b1_ref[...]
    h = h * jax.nn.sigmoid(h)
    g = jnp.dot(h.astype(jnp.bfloat16), se_w2_ref[...],
                preferred_element_type=jnp.float32) + se_b2_ref[...]
    g = jax.nn.sigmoid(g)                                   # (Bb, Cs)
    y2 = (y3 * g[:, None, :]).reshape(M, Cs)

    # ---- pointwise (1x1) projection -> head 1x1 conv + swish ----
    z = jnp.dot(y2.astype(jnp.bfloat16), pw_w_ref[...],
                preferred_element_type=jnp.float32) + pw_b_ref[...]
    z = jnp.dot(z.astype(jnp.bfloat16), head_w_ref[...],
                preferred_element_type=jnp.float32) + head_b_ref[...]
    z = z * jax.nn.sigmoid(z)                               # (M, Ch)

    # ---- global average pool + classifier FC (lane-padded to 128) ----
    pooled = jnp.mean(z.reshape(Bb, HW, Ch), axis=1)        # (Bb, Ch)
    logits = jnp.dot(pooled.astype(jnp.bfloat16), fc_w_ref[...],
                     preferred_element_type=jnp.float32) + fc_b_ref[...]
    o_ref[...] = logits.reshape(Bb, 1, -1).astype(o_ref.dtype)


# ---------------------------------------------------------------------------
# Parameter setup (deterministic, synthetic - no checkpoint loading).
# Channel counts chosen 128-lane dense.  BatchNorm folded into conv bias.
# ---------------------------------------------------------------------------
def init_params(key, c_in=3, c_stem=128, c_se=32, c_block=128, c_head=128,
                n_classes=16):
    ks = jax.random.split(key, 8)
    scale = 0.1
    return {
        "stem_w": scale * jax.random.normal(ks[0], (3, 3, c_in, c_stem), jnp.float32),
        "stem_b": scale * jax.random.normal(ks[1], (1, c_stem), jnp.float32),
        "dw_w":   scale * jax.random.normal(ks[2], (3, 3, c_stem), jnp.float32),
        "se_w1":  scale * jax.random.normal(ks[3], (c_stem, c_se), jnp.float32),
        "se_b1":  jnp.zeros((1, c_se), jnp.float32),
        "se_w2":  scale * jax.random.normal(ks[4], (c_se, c_stem), jnp.float32),
        "se_b2":  jnp.zeros((1, c_stem), jnp.float32),
        "pw_w":   scale * jax.random.normal(ks[5], (c_stem, c_block), jnp.float32),
        "pw_b":   jnp.zeros((1, c_block), jnp.float32),
        "head_w": scale * jax.random.normal(ks[6], (c_block, c_head), jnp.float32),
        "head_b": jnp.zeros((1, c_head), jnp.float32),
        "fc_w":   scale * jax.random.normal(ks[7], (c_head, n_classes), jnp.float32),
        "fc_b":   jnp.zeros((1, n_classes), jnp.float32),
    }


# ---------------------------------------------------------------------------
# Encoder forward: NCHW in (PyTorch convention), (B, n_classes) out.
# ---------------------------------------------------------------------------
def encoder_forward(params, x_nchw):
    x = jnp.transpose(x_nchw, (0, 2, 3, 1)).astype(jnp.float32)   # NHWC
    B, H, W, Cin = x.shape
    assert H % 2 == 0 and W % 2 == 0, "stride-2 stem expects even H/W"
    Ho, Wo = H // 2, W // 2
    assert Wo % 8 == 0, "output width must be sublane (8) aligned"

    n_classes = params["fc_w"].shape[1]
    Cs = params["stem_b"].shape[-1]
    Cr = params["se_w1"].shape[1]
    Cb = params["pw_w"].shape[1]
    Ch = params["head_w"].shape[1]
    C4 = 4 * Cin

    # --- host-side space-to-depth of the 1-padded image (single pass, same
    #     total bytes; replaces the previous 9x im2col HBM expansion) ---
    xp = jnp.pad(x, ((0, 0), (1, 1), (1, 1), (0, 0)))
    xs = xp.reshape(B, Ho + 1, 2, Wo + 1, 2, Cin)
    xs = xs.transpose(0, 1, 3, 2, 4, 5).reshape(B, Ho + 1, Wo + 1, C4)

    # --- pack stem conv weights into 4 shift-grouped (4*Cin, Cs) matrices ---
    w4 = _pack_stem_weights(params["stem_w"]).astype(jnp.bfloat16)

    # --- classifier padded to a lane-dense 128-wide output ---
    n_pad = max(128, ((n_classes + 127) // 128) * 128)
    fc_w = jnp.zeros((Ch, n_pad), jnp.float32).at[:, :n_classes].set(
        params["fc_w"]).astype(jnp.bfloat16)
    fc_b = jnp.zeros((1, n_pad), jnp.float32).at[:, :n_classes].set(
        params["fc_b"])

    Bb = _pick_batch_block(B)
    kern = functools.partial(_encoder_kernel, Bb=Bb, Ho=Ho, Wo=Wo)

    def _full(shape):
        nd = len(shape)
        return pl.BlockSpec(shape, lambda b, _nd=nd: (0,) * _nd)

    flops = (2 * B * Ho * Wo * (4 * C4 * Cs + 9 * Cs + Cs * Cb + Cb * Ch)
             + 2 * B * (Cs * Cr + Cr * Cs + Ch * n_pad))
    trans = B * Ho * Wo * (2 * Cs + Ch) + B * (Cr + 2 * Cs)
    bytes_accessed = (int(xs.size) * 4 + B * n_pad * 4 + int(w4.size) * 2
                      + sum(int(v.size) * 4 for v in params.values()))

    out = pl.pallas_call(
        kern,
        out_shape=jax.ShapeDtypeStruct((B, 1, n_pad), jnp.float32),
        grid=(B // Bb,),
        in_specs=[
            pl.BlockSpec((Bb, Ho + 1, Wo + 1, C4), lambda b: (b, 0, 0, 0)),
            _full((4, C4, Cs)),       # packed stem weights
            _full((1, Cs)),           # stem bias
            _full((3, 3, Cs)),        # depthwise weights
            _full((Cs, Cr)), _full((1, Cr)),      # SE reduce
            _full((Cr, Cs)), _full((1, Cs)),      # SE expand
            _full((Cs, Cb)), _full((1, Cb)),      # pointwise
            _full((Cb, Ch)), _full((1, Ch)),      # head
            _full((Ch, n_pad)), _full((1, n_pad)),  # classifier (lane padded)
        ],
        out_specs=pl.BlockSpec((Bb, 1, n_pad), lambda b: (b, 0, 0)),
        scratch_shapes=[
            # padded depthwise buffer; W dim padded to a multiple of 8.
            pltpu.VMEM((Bb, Ho + 2, Wo + 8, Cs), jnp.float32),
        ],
        compiler_params=pltpu.CompilerParams(
            dimension_semantics=("parallel",),
            vmem_limit_bytes=_vmem_limit_bytes()),
        cost_estimate=pl.CostEstimate(
            flops=flops, transcendentals=trans, bytes_accessed=bytes_accessed),
    )(xs, w4, params["stem_b"],
      params["dw_w"],
      params["se_w1"].astype(jnp.bfloat16), params["se_b1"],
      params["se_w2"].astype(jnp.bfloat16), params["se_b2"],
      params["pw_w"].astype(jnp.bfloat16), params["pw_b"],
      params["head_w"].astype(jnp.bfloat16), params["head_b"],
      fc_w, fc_b)

    return out.reshape(B, n_pad)[:, :n_classes]


if __name__ == "__main__":
    key = jax.random.PRNGKey(0)
    pkey, xkey = jax.random.split(key)
    params = init_params(pkey)

    # Small image batch, NCHW as a PyTorch Encoder would receive.
    x = jax.random.normal(xkey, (2, 3, 16, 16), jnp.float32)

    out = jax.jit(encoder_forward)(params, x)
    jax.block_until_ready(out)
    assert out.shape == (2, 16) and out.dtype == jnp.float32
    print("KERNEL_OK")
</pallas_src>

<mosaic_0001>
module attributes {stable_mosaic.version = 11 : i64} {
  func.func @_encoder_kernel(%arg0: i32, %arg1: memref<1x9x9x12xf32, #tpu.memory_space<vmem>>, %arg2: memref<4x12x128xbf16, #tpu.memory_space<vmem>>, %arg3: memref<1x128xf32, #tpu.memory_space<vmem>>, %arg4: memref<3x3x128xf32, #tpu.memory_space<vmem>>, %arg5: memref<128x32xbf16, #tpu.memory_space<vmem>>, %arg6: memref<1x32xf32, #tpu.memory_space<vmem>>, %arg7: memref<32x128xbf16, #tpu.memory_space<vmem>>, %arg8: memref<1x128xf32, #tpu.memory_space<vmem>>, %arg9: memref<128x128xbf16, #tpu.memory_space<vmem>>, %arg10: memref<1x128xf32, #tpu.memory_space<vmem>>, %arg11: memref<128x128xbf16, #tpu.memory_space<vmem>>, %arg12: memref<1x128xf32, #tpu.memory_space<vmem>>, %arg13: memref<128x128xbf16, #tpu.memory_space<vmem>>, %arg14: memref<1x128xf32, #tpu.memory_space<vmem>>, %arg15: memref<1x1x128xf32, #tpu.memory_space<vmem>>, %arg16: memref<1x10x16x128xf32, #tpu.memory_space<vmem>>) attributes {dimension_semantics = [#tpu.dimension_semantics<parallel>], iteration_bounds = array<i64: 2>, scalar_prefetch = 0 : i64, scratch_operands = 1 : i64, tpu.core_type = #tpu.core_type<tc>, window_params = [{transform_indices = @transform_0, window_bounds = array<i64: 1, 9, 9, 12>}, {pipeline_mode = #tpu.pipeline_mode<synchronous>, transform_indices = @transform_1, window_bounds = array<i64: 4, 12, 128>}, {pipeline_mode = #tpu.pipeline_mode<synchronous>, transform_indices = @transform_2, window_bounds = array<i64: 1, 128>}, {pipeline_mode = #tpu.pipeline_mode<synchronous>, transform_indices = @transform_3, window_bounds = array<i64: 3, 3, 128>}, {pipeline_mode = #tpu.pipeline_mode<synchronous>, transform_indices = @transform_4, window_bounds = array<i64: 128, 32>}, {pipeline_mode = #tpu.pipeline_mode<synchronous>, transform_indices = @transform_5, window_bounds = array<i64: 1, 32>}, {pipeline_mode = #tpu.pipeline_mode<synchronous>, transform_indices = @transform_6, window_bounds = array<i64: 32, 128>}, {pipeline_mode = #tpu.pipeline_mode<synchronous>, transform_indices = @transform_7, window_bounds = array<i64: 1, 128>}, {pipeline_mode = #tpu.pipeline_mode<synchronous>, transform_indices = @transform_8, window_bounds = array<i64: 128, 128>}, {pipeline_mode = #tpu.pipeline_mode<synchronous>, transform_indices = @transform_9, window_bounds = array<i64: 1, 128>}, {pipeline_mode = #tpu.pipeline_mode<synchronous>, transform_indices = @transform_10, window_bounds = array<i64: 128, 128>}, {pipeline_mode = #tpu.pipeline_mode<synchronous>, transform_indices = @transform_11, window_bounds = array<i64: 1, 128>}, {pipeline_mode = #tpu.pipeline_mode<synchronous>, transform_indices = @transform_12, window_bounds = array<i64: 128, 128>}, {pipeline_mode = #tpu.pipeline_mode<synchronous>, transform_indices = @transform_13, window_bounds = array<i64: 1, 128>}, {transform_indices = @transform_14, window_bounds = array<i64: 1, 1, 128>}]} {
    %cst = arith.constant 0.000000e+00 : f32
    %0 = vector.broadcast %cst : f32 to vector<64x128xf32>
    %c0 = arith.constant 0 : index
    %c0_0 = arith.constant 0 : index
    %c0_1 = arith.constant 0 : index
    %c0_2 = arith.constant 0 : index
    %1 = vector.load %arg1[%c0, %c0_0, %c0_1, %c0_2] : memref<1x9x9x12xf32, #tpu.memory_space<vmem>>, vector<1x8x8x12xf32>
    %2 = vector.shape_cast %1 : vector<1x8x8x12xf32> to vector<64x12xf32>
    %3 = arith.truncf %2 : vector<64x12xf32> to vector<64x12xbf16>
    %c0_3 = arith.constant 0 : index
    %c0_4 = arith.constant 0 : index
    %c0_5 = arith.constant 0 : index
    %4 = vector.load %arg2[%c0_3, %c0_4, %c0_5] : memref<4x12x128xbf16, #tpu.memory_space<vmem>>, vector<1x12x128xbf16>
    %5 = vector.shape_cast %4 : vector<1x12x128xbf16> to vector<12x128xbf16>
    %cst_6 = arith.constant dense<0.000000e+00> : vector<64x128xf32>
    %6 = tpu.matmul %3, %5, %cst_6 {dimension_numbers = #tpu.dot_dimension_numbers<[1], [0], [0], [1], [0, 0, 1, 1], [], []>} : vector<64x12xbf16>, vector<12x128xbf16>, vector<64x128xf32> -> vector<64x128xf32>
    %7 = arith.addf %0, %6 : vector<64x128xf32>
    %c0_7 = arith.constant 0 : index
    %c0_8 = arith.constant 0 : index
    %c1 = arith.constant 1 : index
    %c0_9 = arith.constant 0 : index
    %8 = vector.load %arg1[%c0_7, %c0_8, %c1, %c0_9] : memref<1x9x9x12xf32, #tpu.memory_space<vmem>>, vector<1x8x8x12xf32>
    %9 = vector.shape_cast %8 : vector<1x8x8x12xf32> to vector<64x12xf32>
    %10 = arith.truncf %9 : vector<64x12xf32> to vector<64x12xbf16>
    %c1_10 = arith.constant 1 : index
    %c0_11 = arith.constant 0 : index
    %c0_12 = arith.constant 0 : index
    %11 = vector.load %arg2[%c1_10, %c0_11, %c0_12] : memref<4x12x128xbf16, #tpu.memory_space<vmem>>, vector<1x12x128xbf16>
    %12 = vector.shape_cast %11 : vector<1x12x128xbf16> to vector<12x128xbf16>
    %cst_13 = arith.constant dense<0.000000e+00> : vector<64x128xf32>
    %13 = tpu.matmul %10, %12, %cst_13 {dimension_numbers = #tpu.dot_dimension_numbers<[1], [0], [0], [1], [0, 0, 1, 1], [], []>} : vector<64x12xbf16>, vector<12x128xbf16>, vector<64x128xf32> -> vector<64x128xf32>
    %14 = arith.addf %7, %13 : vector<64x128xf32>
    %c0_14 = arith.constant 0 : index
    %c1_15 = arith.constant 1 : index
    %c0_16 = arith.constant 0 : index
    %c0_17 = arith.constant 0 : index
    %15 = vector.load %arg1[%c0_14, %c1_15, %c0_16, %c0_17] : memref<1x9x9x12xf32, #tpu.memory_space<vmem>>, vector<1x8x8x12xf32>
    %16 = vector.shape_cast %15 : vector<1x8x8x12xf32> to vector<64x12xf32>
    %17 = arith.truncf %16 : vector<64x12xf32> to vector<64x12xbf16>
    %c2 = arith.constant 2 : index
    %c0_18 = arith.constant 0 : index
    %c0_19 = arith.constant 0 : index
    %18 = vector.load %arg2[%c2, %c0_18, %c0_19] : memref<4x12x128xbf16, #tpu.memory_space<vmem>>, vector<1x12x128xbf16>
    %19 = vector.shape_cast %18 : vector<1x12x128xbf16> to vector<12x128xbf16>
    %cst_20 = arith.constant dense<0.000000e+00> : vector<64x128xf32>
    %20 = tpu.matmul %17, %19, %cst_20 {dimension_numbers = #tpu.dot_dimension_numbers<[1], [0], [0], [1], [0, 0, 1, 1], [], []>} : vector<64x12xbf16>, vector<12x128xbf16>, vector<64x128xf32> -> vector<64x128xf32>
    %21 = arith.addf %14, %20 : vector<64x128xf32>
    %c0_21 = arith.constant 0 : index
    %c1_22 = arith.constant 1 : index
    %c1_23 = arith.constant 1 : index
    %c0_24 = arith.constant 0 : index
    %22 = vector.load %arg1[%c0_21, %c1_22, %c1_23, %c0_24] : memref<1x9x9x12xf32, #tpu.memory_space<vmem>>, vector<1x8x8x12xf32>
    %23 = vector.shape_cast %22 : vector<1x8x8x12xf32> to vector<64x12xf32>
    %24 = arith.truncf %23 : vector<64x12xf32> to vector<64x12xbf16>
    %c3 = arith.constant 3 : index
    %c0_25 = arith.constant 0 : index
    %c0_26 = arith.constant 0 : index
    %25 = vector.load %arg2[%c3, %c0_25, %c0_26] : memref<4x12x128xbf16, #tpu.memory_space<vmem>>, vector<1x12x128xbf16>
    %26 = vector.shape_cast %25 : vector<1x12x128xbf16> to vector<12x128xbf16>
    %cst_27 = arith.constant dense<0.000000e+00> : vector<64x128xf32>
    %27 = tpu.matmul %24, %26, %cst_27 {dimension_numbers = #tpu.dot_dimension_numbers<[1], [0], [0], [1], [0, 0, 1, 1], [], []>} : vector<64x12xbf16>, vector<12x128xbf16>, vector<64x128xf32> -> vector<64x128xf32>
    %28 = arith.addf %21, %27 : vector<64x128xf32>
    %c0_28 = arith.constant 0 : index
    %c0_29 = arith.constant 0 : index
    %29 = vector.load %arg3[%c0_28, %c0_29] : memref<1x128xf32, #tpu.memory_space<vmem>>, vector<1x128xf32>
    %30 = vector.broadcast %29 : vector<1x128xf32> to vector<64x128xf32>
    %31 = arith.addf %28, %30 : vector<64x128xf32>
    %32 = arith.negf %31 : vector<64x128xf32>
    %33 = math.exp %32 : vector<64x128xf32>
    %cst_30 = arith.constant 1.000000e+00 : f32
    %34 = vector.broadcast %cst_30 : f32 to vector<64x128xf32>
    %35 = arith.addf %34, %33 : vector<64x128xf32>
    %36 = arith.divf %34, %35 : vector<64x128xf32>
    %37 = arith.mulf %31, %36 : vector<64x128xf32>
    %cst_31 = arith.constant 0.000000e+00 : f32
    %38 = vector.broadcast %cst_31 : f32 to vector<1x1x10x128xf32>
    %c0_32 = arith.constant 0 : index
    %c0_33 = arith.constant 0 : index
    %c0_34 = arith.constant 0 : index
    %c0_35 = arith.constant 0 : index
    %39 = vector.load %arg16[%c0_32, %c0_33, %c0_34, %c0_35] : memref<1x10x16x128xf32, #tpu.memory_space<vmem>>, vector<1x1x10x128xf32>
    tpu.vector_store %arg16[%c0_32, %c0_33, %c0_34, %c0_35], %38 {strides = array<i32>} : memref<1x10x16x128xf32, #tpu.memory_space<vmem>>, vector<1x1x10x128xf32>,
    %c0_36 = arith.constant 0 : index
    %c9 = arith.constant 9 : index
    %c0_37 = arith.constant 0 : index
    %c0_38 = arith.constant 0 : index
    %40 = vector.load %arg16[%c0_36, %c9, %c0_37, %c0_38] : memref<1x10x16x128xf32, #tpu.memory_space<vmem>>, vector<1x1x10x128xf32>
    tpu.vector_store %arg16[%c0_36, %c9, %c0_37, %c0_38], %38 {strides = array<i32>} : memref<1x10x16x128xf32, #tpu.memory_space<vmem>>, vector<1x1x10x128xf32>,
    %cst_39 = arith.constant 0.000000e+00 : f32
    %41 = vector.broadcast %cst_39 : f32 to vector<1x8x1x128xf32>
    %c0_40 = arith.constant 0 : index
    %c1_41 = arith.constant 1 : index
    %c0_42 = arith.constant 0 : index
    %c0_43 = arith.constant 0 : index
    %42 = vector.load %arg16[%c0_40, %c1_41, %c0_42, %c0_43] : memref<1x10x16x128xf32, #tpu.memory_space<vmem>>, vector<1x8x1x128xf32>
    tpu.vector_store %arg16[%c0_40, %c1_41, %c0_42, %c0_43], %41 {strides = array<i32>} : memref<1x10x16x128xf32, #tpu.memory_space<vmem>>, vector<1x8x1x128xf32>,
    %c0_44 = arith.constant 0 : index
    %c1_45 = arith.constant 1 : index
    %c9_46 = arith.constant 9 : index
    %c0_47 = arith.constant 0 : index
    %43 = vector.load %arg16[%c0_44, %c1_45, %c9_46, %c0_47] : memref<1x10x16x128xf32, #tpu.memory_space<vmem>>, vector<1x8x1x128xf32>
    tpu.vector_store %arg16[%c0_44, %c1_45, %c9_46, %c0_47], %41 {strides = array<i32>} : memref<1x10x16x128xf32, #tpu.memory_space<vmem>>, vector<1x8x1x128xf32>,
    %44 = vector.shape_cast %37 : vector<64x128xf32> to vector<1x8x8x128xf32>
    %c0_48 = arith.constant 0 : index
    %c1_49 = arith.constant 1 : index
    %c1_50 = arith.constant 1 : index
    %c0_51 = arith.constant 0 : index
    %45 = vector.load %arg16[%c0_48, %c1_49, %c1_50, %c0_51] : memref<1x10x16x128xf32, #tpu.memory_space<vmem>>, vector<1x8x8x128xf32>
    tpu.vector_store %arg16[%c0_48, %c1_49, %c1_50, %c0_51], %44 {strides = array<i32>} : memref<1x10x16x128xf32, #tpu.memory_space<vmem>>, vector<1x8x8x128xf32>,
    %cst_52 = arith.constant 0.000000e+00 : f32
    %46 = vector.broadcast %cst_52 : f32 to vector<1x8x8x128xf32>
    %c0_53 = arith.constant 0 : index
    %c0_54 = arith.constant 0 : index
    %c0_55 = arith.constant 0 : index
    %c0_56 = arith.constant 0 : index
    %47 = vector.load %arg16[%c0_53, %c0_54, %c0_55, %c0_56] : memref<1x10x16x128xf32, #tpu.memory_space<vmem>>, vector<1x8x8x128xf32>
    %c0_57 = arith.constant 0 : index
    %c0_58 = arith.constant 0 : index
    %c0_59 = arith.constant 0 : index
    %48 = vector.load %arg4[%c0_57, %c0_58, %c0_59] : memref<3x3x128xf32, #tpu.memory_space<vmem>>, vector<1x1x128xf32>
    %49 = vector.shape_cast %48 : vector<1x1x128xf32> to vector<128xf32>
    %50 = vector.shape_cast %49 : vector<128xf32> to vector<1x1x1x128xf32>
    %51 = vector.broadcast %50 : vector<1x1x1x128xf32> to vector<1x8x8x128xf32>
    %52 = arith.mulf %47, %51 : vector<1x8x8x128xf32>
    %53 = arith.addf %46, %52 : vector<1x8x8x128xf32>
    %c0_60 = arith.constant 0 : index
    %c0_61 = arith.constant 0 : index
    %c1_62 = arith.constant 1 : index
    %c0_63 = arith.constant 0 : index
    %54 = vector.load %arg16[%c0_60, %c0_61, %c1_62, %c0_63] : memref<1x10x16x128xf32, #tpu.memory_space<vmem>>, vector<1x8x8x128xf32>
    %c0_64 = arith.constant 0 : index
    %c1_65 = arith.constant 1 : index
    %c0_66 = arith.constant 0 : index
    %55 = vector.load %arg4[%c0_64, %c1_65, %c0_66] : memref<3x3x128xf32, #tpu.memory_space<vmem>>, vector<1x1x128xf32>
    %56 = vector.shape_cast %55 : vector<1x1x128xf32> to vector<128xf32>
    %57 = vector.shape_cast %56 : vector<128xf32> to vector<1x1x1x128xf32>
    %58 = vector.broadcast %57 : vector<1x1x1x128xf32> to vector<1x8x8x128xf32>
    %59 = arith.mulf %54, %58 : vector<1x8x8x128xf32>
    %60 = arith.addf %53, %59 : vector<1x8x8x128xf32>
    %c0_67 = arith.constant 0 : index
    %c0_68 = arith.constant 0 : index
    %c2_69 = arith.constant 2 : index
    %c0_70 = arith.constant 0 : index
    %61 = vector.load %arg16[%c0_67, %c0_68, %c2_69, %c0_70] : memref<1x10x16x128xf32, #tpu.memory_space<vmem>>, vector<1x8x8x128xf32>
    %c0_71 = arith.constant 0 : index
    %c2_72 = arith.constant 2 : index
    %c0_73 = arith.constant 0 : index
    %62 = vector.load %arg4[%c0_71, %c2_72, %c0_73] : memref<3x3x128xf32, #tpu.memory_space<vmem>>, vector<1x1x128xf32>
    %63 = vector.shape_cast %62 : vector<1x1x128xf32> to vector<128xf32>
    %64 = vector.shape_cast %63 : vector<128xf32> to vector<1x1x1x128xf32>
    %65 = vector.broadcast %64 : vector<1x1x1x128xf32> to vector<1x8x8x128xf32>
    %66 = arith.mulf %61, %65 : vector<1x8x8x128xf32>
    %67 = arith.addf %60, %66 : vector<1x8x8x128xf32>
    %c0_74 = arith.constant 0 : index
    %c1_75 = arith.constant 1 : index
    %c0_76 = arith.constant 0 : index
    %c0_77 = arith.constant 0 : index
    %68 = vector.load %arg16[%c0_74, %c1_75, %c0_76, %c0_77] : memref<1x10x16x128xf32, #tpu.memory_space<vmem>>, vector<1x8x8x128xf32>
    %c1_78 = arith.constant 1 : index
    %c0_79 = arith.constant 0 : index
    %c0_80 = arith.constant 0 : index
    %69 = vector.load %arg4[%c1_78, %c0_79, %c0_80] : memref<3x3x128xf32, #tpu.memory_space<vmem>>, vector<1x1x128xf32>
    %70 = vector.shape_cast %69 : vector<1x1x128xf32> to vector<128xf32>
    %71 = vector.shape_cast %70 : vector<128xf32> to vector<1x1x1x128xf32>
    %72 = vector.broadcast %71 : vector<1x1x1x128xf32> to vector<1x8x8x128xf32>
    %73 = arith.mulf %68, %72 : vector<1x8x8x128xf32>
    %74 = arith.addf %67, %73 : vector<1x8x8x128xf32>
    %c0_81 = arith.constant 0 : index
    %c1_82 = arith.constant 1 : index
    %c1_83 = arith.constant 1 : index
    %c0_84 = arith.constant 0 : index
    %75 = vector.load %arg16[%c0_81, %c1_82, %c1_83, %c0_84] : memref<1x10x16x128xf32, #tpu.memory_space<vmem>>, vector<1x8x8x128xf32>
    %c1_85 = arith.constant 1 : index
    %c1_86 = arith.constant 1 : index
    %c0_87 = arith.constant 0 : index
    %76 = vector.load %arg4[%c1_85, %c1_86, %c0_87] : memref<3x3x128xf32, #tpu.memory_space<vmem>>, vector<1x1x128xf32>
    %77 = vector.shape_cast %76 : vector<1x1x128xf32> to vector<128xf32>
    %78 = vector.shape_cast %77 : vector<128xf32> to vector<1x1x1x128xf32>
    %79 = vector.broadcast %78 : vector<1x1x1x128xf32> to vector<1x8x8x128xf32>
    %80 = arith.mulf %75, %79 : vector<1x8x8x128xf32>
    %81 = arith.addf %74, %80 : vector<1x8x8x128xf32>
    %c0_88 = arith.constant 0 : index
    %c1_89 = arith.constant 1 : index
    %c2_90 = arith.constant 2 : index
    %c0_91 = arith.constant 0 : index
    %82 = vector.load %arg16[%c0_88, %c1_89, %c2_90, %c0_91] : memref<1x10x16x128xf32, #tpu.memory_space<vmem>>, vector<1x8x8x128xf32>
    %c1_92 = arith.constant 1 : index
    %c2_93 = arith.constant 2 : index
    %c0_94 = arith.constant 0 : index
    %83 = vector.load %arg4[%c1_92, %c2_93, %c0_94] : memref<3x3x128xf32, #tpu.memory_space<vmem>>, vector<1x1x128xf32>
    %84 = vector.shape_cast %83 : vector<1x1x128xf32> to vector<128xf32>
    %85 = vector.shape_cast %84 : vector<128xf32> to vector<1x1x1x128xf32>
    %86 = vector.broadcast %85 : vector<1x1x1x128xf32> to vector<1x8x8x128xf32>
    %87 = arith.mulf %82, %86 : vector<1x8x8x128xf32>
    %88 = arith.addf %81, %87 : vector<1x8x8x128xf32>
    %c0_95 = arith.constant 0 : index
    %c2_96 = arith.constant 2 : index
    %c0_97 = arith.constant 0 : index
    %c0_98 = arith.constant 0 : index
    %89 = vector.load %arg16[%c0_95, %c2_96, %c0_97, %c0_98] : memref<1x10x16x128xf32, #tpu.memory_space<vmem>>, vector<1x8x8x128xf32>
    %c2_99 = arith.constant 2 : index
    %c0_100 = arith.constant 0 : index
    %c0_101 = arith.constant 0 : index
    %90 = vector.load %arg4[%c2_99, %c0_100, %c0_101] : memref<3x3x128xf32, #tpu.memory_space<vmem>>, vector<1x1x128xf32>
    %91 = vector.shape_cast %90 : vector<1x1x128xf32> to vector<128xf32>
    %92 = vector.shape_cast %91 : vector<128xf32> to vector<1x1x1x128xf32>
    %93 = vector.broadcast %92 : vector<1x1x1x128xf32> to vector<1x8x8x128xf32>
    %94 = arith.mulf %89, %93 : vector<1x8x8x128xf32>
    %95 = arith.addf %88, %94 : vector<1x8x8x128xf32>
    %c0_102 = arith.constant 0 : index
    %c2_103 = arith.constant 2 : index
    %c1_104 = arith.constant 1 : index
    %c0_105 = arith.constant 0 : index
    %96 = vector.load %arg16[%c0_102, %c2_103, %c1_104, %c0_105] : memref<1x10x16x128xf32, #tpu.memory_space<vmem>>, vector<1x8x8x128xf32>
    %c2_106 = arith.constant 2 : index
    %c1_107 = arith.constant 1 : index
    %c0_108 = arith.constant 0 : index
    %97 = vector.load %arg4[%c2_106, %c1_107, %c0_108] : memref<3x3x128xf32, #tpu.memory_space<vmem>>, vector<1x1x128xf32>
    %98 = vector.shape_cast %97 : vector<1x1x128xf32> to vector<128xf32>
    %99 = vector.shape_cast %98 : vector<128xf32> to vector<1x1x1x128xf32>
    %100 = vector.broadcast %99 : vector<1x1x1x128xf32> to vector<1x8x8x128xf32>
    %101 = arith.mulf %96, %100 : vector<1x8x8x128xf32>
    %102 = arith.addf %95, %101 : vector<1x8x8x128xf32>
    %c0_109 = arith.constant 0 : index
    %c2_110 = arith.constant 2 : index
    %c2_111 = arith.constant 2 : index
    %c0_112 = arith.constant 0 : index
    %103 = vector.load %arg16[%c0_109, %c2_110, %c2_111, %c0_112] : memref<1x10x16x128xf32, #tpu.memory_space<vmem>>, vector<1x8x8x128xf32>
    %c2_113 = arith.constant 2 : index
    %c2_114 = arith.constant 2 : index
    %c0_115 = arith.constant 0 : index
    %104 = vector.load %arg4[%c2_113, %c2_114, %c0_115] : memref<3x3x128xf32, #tpu.memory_space<vmem>>, vector<1x1x128xf32>
    %105 = vector.shape_cast %104 : vector<1x1x128xf32> to vector<128xf32>
    %106 = vector.shape_cast %105 : vector<128xf32> to vector<1x1x1x128xf32>
    %107 = vector.broadcast %106 : vector<1x1x1x128xf32> to vector<1x8x8x128xf32>
    %108 = arith.mulf %103, %107 : vector<1x8x8x128xf32>
    %109 = arith.addf %102, %108 : vector<1x8x8x128xf32>
    %110 = arith.negf %109 : vector<1x8x8x128xf32>
    %111 = math.exp %110 : vector<1x8x8x128xf32>
    %cst_116 = arith.constant 1.000000e+00 : f32
    %112 = vector.broadcast %cst_116 : f32 to vector<1x8x8x128xf32>
    %113 = arith.addf %112, %111 : vector<1x8x8x128xf32>
    %114 = arith.divf %112, %113 : vector<1x8x8x128xf32>
    %115 = arith.mulf %109, %114 : vector<1x8x8x128xf32>
    %116 = vector.shape_cast %115 : vector<1x8x8x128xf32> to vector<1x64x128xf32>
    %cst_117 = arith.constant dense<0.000000e+00> : vector<1x128xf32>
    %117 = vector.multi_reduction <add>, %116, %cst_117 [1] : vector<1x64x128xf32> to vector<1x128xf32>
    %cst_118 = arith.constant 6.400000e+01 : f32
    %118 = vector.broadcast %cst_118 : f32 to vector<1x128xf32>
    %119 = arith.divf %117, %118 : vector<1x128xf32>
    %120 = arith.truncf %119 : vector<1x128xf32> to vector<1x128xbf16>
    %c0_119 = arith.constant 0 : index
    %c0_120 = arith.constant 0 : index
    %121 = vector.load %arg5[%c0_119, %c0_120] : memref<128x32xbf16, #tpu.memory_space<vmem>>, vector<128x32xbf16>
    %cst_121 = arith.constant dense<0.000000e+00> : vector<1x32xf32>
    %122 = tpu.matmul %120, %121, %cst_121 {dimension_numbers = #tpu.dot_dimension_numbers<[1], [0], [0], [1], [0, 0, 1, 1], [], []>} : vector<1x128xbf16>, vector<128x32xbf16>, vector<1x32xf32> -> vector<1x32xf32>
    %c0_122 = arith.constant 0 : index
    %c0_123 = arith.constant 0 : index
    %123 = vector.load %arg6[%c0_122, %c0_123] : memref<1x32xf32, #tpu.memory_space<vmem>>, vector<1x32xf32>
    %124 = arith.addf %122, %123 : vector<1x32xf32>
    %125 = arith.negf %124 : vector<1x32xf32>
    %126 = math.exp %125 : vector<1x32xf32>
    %cst_124 = arith.constant 1.000000e+00 : f32
    %127 = vector.broadcast %cst_124 : f32 to vector<1x32xf32>
    %128 = arith.addf %127, %126 : vector<1x32xf32>
    %129 = arith.divf %127, %128 : vector<1x32xf32>
    %130 = arith.mulf %124, %129 : vector<1x32xf32>
    %131 = arith.truncf %130 : vector<1x32xf32> to vector<1x32xbf16>
    %c0_125 = arith.constant 0 : index
    %c0_126 = arith.constant 0 : index
    %132 = vector.load %arg7[%c0_125, %c0_126] : memref<32x128xbf16, #tpu.memory_space<vmem>>, vector<32x128xbf16>
    %cst_127 = arith.constant dense<0.000000e+00> : vector<1x128xf32>
    %133 = tpu.matmul %131, %132, %cst_127 {dimension_numbers = #tpu.dot_dimension_numbers<[1], [0], [0], [1], [0, 0, 1, 1], [], []>} : vector<1x32xbf16>, vector<32x128xbf16>, vector<1x128xf32> -> vector<1x128xf32>
    %c0_128 = arith.constant 0 : index
    %c0_129 = arith.constant 0 : index
    %134 = vector.load %arg8[%c0_128, %c0_129] : memref<1x128xf32, #tpu.memory_space<vmem>>, vector<1x128xf32>
    %135 = arith.addf %133, %134 : vector<1x128xf32>
    %136 = arith.negf %135 : vector<1x128xf32>
    %137 = math.exp %136 : vector<1x128xf32>
    %cst_130 = arith.constant 1.000000e+00 : f32
    %138 = vector.broadcast %cst_130 : f32 to vector<1x128xf32>
    %139 = arith.addf %138, %137 : vector<1x128xf32>
    %140 = arith.divf %138, %139 : vector<1x128xf32>
    %141 = vector.shape_cast %140 : vector<1x128xf32> to vector<1x1x128xf32>
    %142 = vector.broadcast %141 : vector<1x1x128xf32> to vector<1x64x128xf32>
    %143 = arith.mulf %116, %142 : vector<1x64x128xf32>
    %144 = vector.shape_cast %143 : vector<1x64x128xf32> to vector<64x128xf32>
    %145 = arith.truncf %144 : vector<64x128xf32> to vector<64x128xbf16>
    %c0_131 = arith.constant 0 : index
    %c0_132 = arith.constant 0 : index
    %146 = vector.load %arg9[%c0_131, %c0_132] : memref<128x128xbf16, #tpu.memory_space<vmem>>, vector<128x128xbf16>
    %cst_133 = arith.constant dense<0.000000e+00> : vector<64x128xf32>
    %147 = tpu.matmul %145, %146, %cst_133 {dimension_numbers = #tpu.dot_dimension_numbers<[1], [0], [0], [1], [0, 0, 1, 1], [], []>} : vector<64x128xbf16>, vector<128x128xbf16>, vector<64x128xf32> -> vector<64x128xf32>
    %c0_134 = arith.constant 0 : index
    %c0_135 = arith.constant 0 : index
    %148 = vector.load %arg10[%c0_134, %c0_135] : memref<1x128xf32, #tpu.memory_space<vmem>>, vector<1x128xf32>
    %149 = vector.broadcast %148 : vector<1x128xf32> to vector<64x128xf32>
    %150 = arith.addf %147, %149 : vector<64x128xf32>
    %151 = arith.truncf %150 : vector<64x128xf32> to vector<64x128xbf16>
    %c0_136 = arith.constant 0 : index
    %c0_137 = arith.constant 0 : index
    %152 = vector.load %arg11[%c0_136, %c0_137] : memref<128x128xbf16, #tpu.memory_space<vmem>>, vector<128x128xbf16>
    %cst_138 = arith.constant dense<0.000000e+00> : vector<64x128xf32>
    %153 = tpu.matmul %151, %152, %cst_138 {dimension_numbers = #tpu.dot_dimension_numbers<[1], [0], [0], [1], [0, 0, 1, 1], [], []>} : vector<64x128xbf16>, vector<128x128xbf16>, vector<64x128xf32> -> vector<64x128xf32>
    %c0_139 = arith.constant 0 : index
    %c0_140 = arith.constant 0 : index
    %154 = vector.load %arg12[%c0_139, %c0_140] : memref<1x128xf32, #tpu.memory_space<vmem>>, vector<1x128xf32>
    %155 = vector.broadcast %154 : vector<1x128xf32> to vector<64x128xf32>
    %156 = arith.addf %153, %155 : vector<64x128xf32>
    %157 = arith.negf %156 : vector<64x128xf32>
    %158 = math.exp %157 : vector<64x128xf32>
    %cst_141 = arith.constant 1.000000e+00 : f32
    %159 = vector.broadcast %cst_141 : f32 to vector<64x128xf32>
    %160 = arith.addf %159, %158 : vector<64x128xf32>
    %161 = arith.divf %159, %160 : vector<64x128xf32>
    %162 = arith.mulf %156, %161 : vector<64x128xf32>
    %163 = vector.shape_cast %162 : vector<64x128xf32> to vector<1x64x128xf32>
    %cst_142 = arith.constant dense<0.000000e+00> : vector<1x128xf32>
    %164 = vector.multi_reduction <add>, %163, %cst_142 [1] : vector<1x64x128xf32> to vector<1x128xf32>
    %cst_143 = arith.constant 6.400000e+01 : f32
    %165 = vector.broadcast %cst_143 : f32 to vector<1x128xf32>
    %166 = arith.divf %164, %165 : vector<1x128xf32>
    %167 = arith.truncf %166 : vector<1x128xf32> to vector<1x128xbf16>
    %c0_144 = arith.constant 0 : index
    %c0_145 = arith.constant 0 : index
    %168 = vector.load %arg13[%c0_144, %c0_145] : memref<128x128xbf16, #tpu.memory_space<vmem>>, vector<128x128xbf16>
    %cst_146 = arith.constant dense<0.000000e+00> : vector<1x128xf32>
    %169 = tpu.matmul %167, %168, %cst_146 {dimension_numbers = #tpu.dot_dimension_numbers<[1], [0], [0], [1], [0, 0, 1, 1], [], []>} : vector<1x128xbf16>, vector<128x128xbf16>, vector<1x128xf32> -> vector<1x128xf32>
    %c0_147 = arith.constant 0 : index
    %c0_148 = arith.constant 0 : index
    %170 = vector.load %arg14[%c0_147, %c0_148] : memref<1x128xf32, #tpu.memory_space<vmem>>, vector<1x128xf32>
    %171 = arith.addf %169, %170 : vector<1x128xf32>
    %172 = vector.shape_cast %171 : vector<1x128xf32> to vector<1x1x128xf32>
    %c0_149 = arith.constant 0 : index
    %c0_150 = arith.constant 0 : index
    %c0_151 = arith.constant 0 : index
    %173 = vector.load %arg15[%c0_149, %c0_150, %c0_151] : memref<1x1x128xf32, #tpu.memory_space<vmem>>, vector<1x1x128xf32>
    tpu.vector_store %arg15[%c0_149, %c0_150, %c0_151], %172 {strides = array<i32>} : memref<1x1x128xf32, #tpu.memory_space<vmem>>, vector<1x1x128xf32>,
    return
  }
  func.func @transform_0(%arg0: i32) -> (i32, i32, i32, i32) {
    %c0_i32 = arith.constant 0 : i32
    %c0_i32_0 = arith.constant 0 : i32
    %c0_i32_1 = arith.constant 0 : i32
    %c0_i32_2 = arith.constant 0 : i32
    return %arg0, %c0_i32, %c0_i32_0, %c0_i32_1 : i32, i32, i32, i32
  }
  func.func @transform_1(%arg0: i32) -> (i32, i32, i32) {
    %c0_i32 = arith.constant 0 : i32
    %c0_i32_0 = arith.constant 0 : i32
    %c0_i32_1 = arith.constant 0 : i32
    %c0_i32_2 = arith.constant 0 : i32
    return %c0_i32, %c0_i32_0, %c0_i32_1 : i32, i32, i32
  }
  func.func @transform_2(%arg0: i32) -> (i32, i32) {
    %c0_i32 = arith.constant 0 : i32
    %c0_i32_0 = arith.constant 0 : i32
    %c0_i32_1 = arith.constant 0 : i32
    return %c0_i32, %c0_i32_0 : i32, i32
  }
  func.func @transform_3(%arg0: i32) -> (i32, i32, i32) {
    %c0_i32 = arith.constant 0 : i32
    %c0_i32_0 = arith.constant 0 : i32
    %c0_i32_1 = arith.constant 0 : i32
    %c0_i32_2 = arith.constant 0 : i32
    return %c0_i32, %c0_i32_0, %c0_i32_1 : i32, i32, i32
  }
  func.func @transform_4(%arg0: i32) -> (i32, i32) {
    %c0_i32 = arith.constant 0 : i32
    %c0_i32_0 = arith.constant 0 : i32
    %c0_i32_1 = arith.constant 0 : i32
    return %c0_i32, %c0_i32_0 : i32, i32
  }
  func.func @transform_5(%arg0: i32) -> (i32, i32) {
    %c0_i32 = arith.constant 0 : i32
    %c0_i32_0 = arith.constant 0 : i32
    %c0_i32_1 = arith.constant 0 : i32
    return %c0_i32, %c0_i32_0 : i32, i32
  }
  func.func @transform_6(%arg0: i32) -> (i32, i32) {
    %c0_i32 = arith.constant 0 : i32
    %c0_i32_0 = arith.constant 0 : i32
    %c0_i32_1 = arith.constant 0 : i32
    return %c0_i32, %c0_i32_0 : i32, i32
  }
  func.func @transform_7(%arg0: i32) -> (i32, i32) {
    %c0_i32 = arith.constant 0 : i32
    %c0_i32_0 = arith.constant 0 : i32
    %c0_i32_1 = arith.constant 0 : i32
    return %c0_i32, %c0_i32_0 : i32, i32
  }
  func.func @transform_8(%arg0: i32) -> (i32, i32) {
    %c0_i32 = arith.constant 0 : i32
    %c0_i32_0 = arith.constant 0 : i32
    %c0_i32_1 = arith.constant 0 : i32
    return %c0_i32, %c0_i32_0 : i32, i32
  }
  func.func @transform_9(%arg0: i32) -> (i32, i32) {
    %c0_i32 = arith.constant 0 : i32
    %c0_i32_0 = arith.constant 0 : i32
    %c0_i32_1 = arith.constant 0 : i32
    return %c0_i32, %c0_i32_0 : i32, i32
  }
  func.func @transform_10(%arg0: i32) -> (i32, i32) {
    %c0_i32 = arith.constant 0 : i32
    %c0_i32_0 = arith.constant 0 : i32
    %c0_i32_1 = arith.constant 0 : i32
    return %c0_i32, %c0_i32_0 : i32, i32
  }
  func.func @transform_11(%arg0: i32) -> (i32, i32) {
    %c0_i32 = arith.constant 0 : i32
    %c0_i32_0 = arith.constant 0 : i32
    %c0_i32_1 = arith.constant 0 : i32
    return %c0_i32, %c0_i32_0 : i32, i32
  }
  func.func @transform_12(%arg0: i32) -> (i32, i32) {
    %c0_i32 = arith.constant 0 : i32
    %c0_i32_0 = arith.constant 0 : i32
    %c0_i32_1 = arith.constant 0 : i32
    return %c0_i32, %c0_i32_0 : i32, i32
  }
  func.func @transform_13(%arg0: i32) -> (i32, i32) {
    %c0_i32 = arith.constant 0 : i32
    %c0_i32_0 = arith.constant 0 : i32
    %c0_i32_1 = arith.constant 0 : i32
    return %c0_i32, %c0_i32_0 : i32, i32
  }
  func.func @transform_14(%arg0: i32) -> (i32, i32, i32) {
    %c0_i32 = arith.constant 0 : i32
    %c0_i32_0 = arith.constant 0 : i32
    %c0_i32_1 = arith.constant 0 : i32
    return %arg0, %c0_i32, %c0_i32_0 : i32, i32, i32
  }
}

</mosaic_0001>

<llo_original>
// kernel: encoder_forward.1
$region0: #{encoder_forward.1}
  #allocation0 [shape = 'u32[]', space=smem, size = 0x4, offset = 0x4, fixed_abs, tag = 'smem constant byte address 0x4 - core index']
  #allocation1 [shape = 'u32[144,128]{1,0:T(1,128)}', space=vmem, size = 0x12000, scoped, tag = 'internal scratch']
  #allocation2 [shape = 'f32[1,10,16,128]{3,2,1,0:T(8,128)}', space=vmem, size = 0x14000, scoped, tag = 'scratch operand']
  %s0 = inlined_call_operand.vmem [shape: f32[2,9,9,12], index: 0, kind: input, shape index: {}]
  %s1 = inlined_call_operand.vmem [shape: bf16[4,12,128], index: 1, kind: input, shape index: {}]
  %s2 = inlined_call_operand.vmem [shape: f32[1,128], index: 2, kind: input, shape index: {}]
  %s3 = inlined_call_operand.vmem [shape: f32[3,3,128], index: 3, kind: input, shape index: {}]
  %s4 = inlined_call_operand.vmem [shape: bf16[128,32], index: 4, kind: input, shape index: {}]
  %s5 = inlined_call_operand.vmem [shape: f32[1,32], index: 5, kind: input, shape index: {}]
  %s6 = inlined_call_operand.vmem [shape: bf16[32,128], index: 6, kind: input, shape index: {}]
  %s7 = inlined_call_operand.vmem [shape: f32[1,128], index: 7, kind: input, shape index: {}]
  %s8 = inlined_call_operand.vmem [shape: bf16[128,128], index: 8, kind: input, shape index: {}]
  %s9 = inlined_call_operand.vmem [shape: f32[1,128], index: 9, kind: input, shape index: {}]
  %s10 = inlined_call_operand.vmem [shape: bf16[128,128], index: 10, kind: input, shape index: {}]
  %s11 = inlined_call_operand.vmem [shape: f32[1,128], index: 11, kind: input, shape index: {}]
  %s12 = inlined_call_operand.vmem [shape: bf16[128,128], index: 12, kind: input, shape index: {}]
  %s13 = inlined_call_operand.vmem [shape: f32[1,128], index: 13, kind: input, shape index: {}]
  %s14 = inlined_call_operand.hbm [shape: f32[2,1,128], index: 14, kind: output, shape index: {}]
  %s15 = sld [smem:[#allocation0]]
  $region89: #{encoder_forward.1} parent=0
    _
  %s17 = ssub.s32 1, %s15
  %s18 = scalar_select 0, %s17, %s15
  $region1: #{encoder_forward.1} parent=0
    #allocation3 [shape = 'u8[1024]{0}', space=vmem, size = 0x400, scoped, tag = 'output window, operand 0']
    #allocation4 [shape = 's32[2]{0}', space=sflag, size = 0x8, scoped, tag = 'scoped memory for encoder_forward.1']
    %19 = vsyncpa [#allocation4], 0
    %s20 = scalar_lea.sflag [#allocation4], 1
    %21 = vsyncpa %s20, 0
    loop: start=0, step=1, limit=4
    $region2: #{encoder_forward.1} parent=1 // loop_pre_header
      _
    $region3: #{encoder_forward.1} parent=1 // loop_header
      %s23 = sphi 0, %s27
      %p24 = scmp.ge.s32.totalorder %s23, 4
      %s33 = sphi 0, %s35
      %s36 = sphi 0, %s33
      %s37 = sphi 0, %s36
      %s53 = sphi 0, %s37
      %s57 = sphi 0, %s57
      %s59 = sphi 0, %s57
      %s60 = sphi 0, %s59
      %s74 = sphi 0, %s60
      %s78 = sphi 0, %s78
      %s80 = sphi 0, %s78
      %s81 = sphi 0, %s80
      %s95 = sphi 0, %s81
      %s99 = sphi 0, %s99
      %s101 = sphi 0, %s99
      %s102 = sphi 0, %s101
      %s116 = sphi 0, %s102
      %s120 = sphi 0, %s120
      %s122 = sphi 0, %s120
      %s123 = sphi 0, %s122
      %s137 = sphi 0, %s123
      %s141 = sphi 0, %s141
      %s143 = sphi 0, %s141
      %s144 = sphi 0, %s143
      %s158 = sphi 0, %s144
      %s162 = sphi 0, %s162
      %s164 = sphi 0, %s162
      %s165 = sphi 0, %s164
      %s179 = sphi 0, %s165
      %s183 = sphi 0, %s183
      %s185 = sphi 0, %s183
      %s186 = sphi 0, %s185
      %s200 = sphi 0, %s186
      %s204 = sphi 0, %s204
      %s206 = sphi 0, %s204
      %s207 = sphi 0, %s206
      %s221 = sphi 0, %s207
      %s225 = sphi 0, %s225
      %s227 = sphi 0, %s225
      %s228 = sphi 0, %s227
      %s242 = sphi 0, %s228
      %s246 = sphi 0, %s246
      %s248 = sphi 0, %s246
      %s249 = sphi 0, %s248
      %s263 = sphi 0, %s249
      %s267 = sphi 0, %s267
      %s269 = sphi 0, %s267
      %s270 = sphi 0, %s269
      %s284 = sphi 0, %s270
      %s288 = sphi 0, %s288
      %s290 = sphi 0, %s288
      %s291 = sphi 0, %s290
      %s305 = sphi 0, %s291
      %s309 = sphi 0, %s309
      %s311 = sphi 0, %s309
      %s312 = sphi 0, %s311
      %s326 = sphi 0, %s312
      %s332 = sphi 0, %s334
      %s335 = sphi 0, %s332
      %s336 = sphi 0, %s335
      %s352 = sphi 0, %s336
    $region4: #{encoder_forward.1} parent=1 // loop_header_branch
      %26 = sbr.rel (%p24) target = $region8
    $region5: #{encoder_forward.1} parent=1 // loop_body
      %s28 = ssub.s32 %s23, 1
      %s29 = ssub.s32 %s23, 2
      %s30 = sadd.s32 %s23, 1
      %s31 = ssub.s32 %s23, %s30
      %p32 = scmp.eq.s32.totalorder %s31, 0
      %s34 = sadd.s32 %s33, 1
      %s35 = scalar_select %p32, %s33, %s34
      %p38 = pneg %p32
      %p39 = scmp.eq.s32.totalorder %s23, 1
      %p40 = por %p38, %p39
      %p41 = scmp.ne.s32.totalorder %s33, %s36
      %p42 = scmp.eq.s32.totalorder %s23, 0
      %p43 = por %p41, %p42
      %p44 = scmp.ne.s32.totalorder %s33, %s36
      %p45 = scmp.eq.s32.totalorder %s28, 1
      %p46 = por %p44, %p45
      %p47 = scmp.ne.s32.totalorder %s36, %s37
      %p48 = scmp.eq.s32.totalorder %s28, 0
      %p49 = por %p47, %p48
      %p50 = scmp.ne.s32.totalorder %s36, %s37
      %p51 = scmp.eq.s32.totalorder %s29, 1
      %p52 = por %p50, %p51
      %p54 = scmp.ne.s32.totalorder %s37, %s53
      %p55 = scmp.eq.s32.totalorder %s29, 0
      %p56 = por %p54, %p55
      %s58 = sadd.s32 %s57, 1
      %p61 = scmp.eq.s32.totalorder %s23, 1
      %p62 = scmp.ne.s32.totalorder %s57, %s59
      %p63 = scmp.eq.s32.totalorder %s23, 0
      %p64 = por %p62, %p63
      %p65 = scmp.ne.s32.totalorder %s57, %s59
      %p66 = scmp.eq.s32.totalorder %s28, 1
      %p67 = por %p65, %p66
      %p68 = scmp.ne.s32.totalorder %s59, %s60
      %p69 = scmp.eq.s32.totalorder %s28, 0
      %p70 = por %p68, %p69
      %p71 = scmp.ne.s32.totalorder %s59, %s60
      %p72 = scmp.eq.s32.totalorder %s29, 1
      %p73 = por %p71, %p72
      %p75 = scmp.ne.s32.totalorder %s60, %s74
      %p76 = scmp.eq.s32.totalorder %s29, 0
      %p77 = por %p75, %p76
      %s79 = sadd.s32 %s78, 1
      %p82 = scmp.eq.s32.totalorder %s23, 1
      %p83 = scmp.ne.s32.totalorder %s78, %s80
      %p84 = scmp.eq.s32.totalorder %s23, 0
      %p85 = por %p83, %p84
      %p86 = scmp.ne.s32.totalorder %s78, %s80
      %p87 = scmp.eq.s32.totalorder %s28, 1
      %p88 = por %p86, %p87
      %p89 = scmp.ne.s32.totalorder %s80, %s81
      %p90 = scmp.eq.s32.totalorder %s28, 0
      %p91 = por %p89, %p90
      %p92 = scmp.ne.s32.totalorder %s80, %s81
      %p93 = scmp.eq.s32.totalorder %s29, 1
      %p94 = por %p92, %p93
      %p96 = scmp.ne.s32.totalorder %s81, %s95
      %p97 = scmp.eq.s32.totalorder %s29, 0
      %p98 = por %p96, %p97
      %s100 = sadd.s32 %s99, 1
      %p103 = scmp.eq.s32.totalorder %s23, 1
      %p104 = scmp.ne.s32.totalorder %s99, %s101
      %p105 = scmp.eq.s32.totalorder %s23, 0
      %p106 = por %p104, %p105
      %p107 = scmp.ne.s32.totalorder %s99, %s101
      %p108 = scmp.eq.s32.totalorder %s28, 1
      %p109 = por %p107, %p108
      %p110 = scmp.ne.s32.totalorder %s101, %s102
      %p111 = scmp.eq.s32.totalorder %s28, 0
      %p112 = por %p110, %p111
      %p113 = scmp.ne.s32.totalorder %s101, %s102
      %p114 = scmp.eq.s32.totalorder %s29, 1
      %p115 = por %p113, %p114
      %p117 = scmp.ne.s32.totalorder %s102, %s116
      %p118 = scmp.eq.s32.totalorder %s29, 0
      %p119 = por %p117, %p118
      %s121 = sadd.s32 %s120, 1
      %p124 = scmp.eq.s32.totalorder %s23, 1
      %p125 = scmp.ne.s32.totalorder %s120, %s122
      %p126 = scmp.eq.s32.totalorder %s23, 0
      %p127 = por %p125, %p126
      %p128 = scmp.ne.s32.totalorder %s120, %s122
      %p129 = scmp.eq.s32.totalorder %s28, 1
      %p130 = por %p128, %p129
      %p131 = scmp.ne.s32.totalorder %s122, %s123
      %p132 = scmp.eq.s32.totalorder %s28, 0
      %p133 = por %p131, %p132
      %p134 = scmp.ne.s32.totalorder %s122, %s123
      %p135 = scmp.eq.s32.totalorder %s29, 1
      %p136 = por %p134, %p135
      %p138 = scmp.ne.s32.totalorder %s123, %s137
      %p139 = scmp.eq.s32.totalorder %s29, 0
      %p140 = por %p138, %p139
      %s142 = sadd.s32 %s141, 1
      %p145 = scmp.eq.s32.totalorder %s23, 1
      %p146 = scmp.ne.s32.totalorder %s141, %s143
      %p147 = scmp.eq.s32.totalorder %s23, 0
      %p148 = por %p146, %p147
      %p149 = scmp.ne.s32.totalorder %s141, %s143
      %p150 = scmp.eq.s32.totalorder %s28, 1
      %p151 = por %p149, %p150
      %p152 = scmp.ne.s32.totalorder %s143, %s144
      %p153 = scmp.eq.s32.totalorder %s28, 0
      %p154 = por %p152, %p153
      %p155 = scmp.ne.s32.totalorder %s143, %s144
      %p156 = scmp.eq.s32.totalorder %s29, 1
      %p157 = por %p155, %p156
      %p159 = scmp.ne.s32.totalorder %s144, %s158
      %p160 = scmp.eq.s32.totalorder %s29, 0
      %p161 = por %p159, %p160
      %s163 = sadd.s32 %s162, 1
      %p166 = scmp.eq.s32.totalorder %s23, 1
      %p167 = scmp.ne.s32.totalorder %s162, %s164
      %p168 = scmp.eq.s32.totalorder %s23, 0
      %p169 = por %p167, %p168
      %p170 = scmp.ne.s32.totalorder %s162, %s164
      %p171 = scmp.eq.s32.totalorder %s28, 1
      %p172 = por %p170, %p171
      %p173 = scmp.ne.s32.totalorder %s164, %s165
      %p174 = scmp.eq.s32.totalorder %s28, 0
      %p175 = por %p173, %p174
      %p176 = scmp.ne.s32.totalorder %s164, %s165
      %p177 = scmp.eq.s32.totalorder %s29, 1
      %p178 = por %p176, %p177
      %p180 = scmp.ne.s32.totalorder %s165, %s179
      %p181 = scmp.eq.s32.totalorder %s29, 0
      %p182 = por %p180, %p181
      %s184 = sadd.s32 %s183, 1
      %p187 = scmp.eq.s32.totalorder %s23, 1
      %p188 = scmp.ne.s32.totalorder %s183, %s185
      %p189 = scmp.eq.s32.totalorder %s23, 0
      %p190 = por %p188, %p189
      %p191 = scmp.ne.s32.totalorder %s183, %s185
      %p192 = scmp.eq.s32.totalorder %s28, 1
      %p193 = por %p191, %p192
      %p194 = scmp.ne.s32.totalorder %s185, %s186
      %p195 = scmp.eq.s32.totalorder %s28, 0
      %p196 = por %p194, %p195
      %p197 = scmp.ne.s32.totalorder %s185, %s186
      %p198 = scmp.eq.s32.totalorder %s29, 1
      %p199 = por %p197, %p198
      %p201 = scmp.ne.s32.totalorder %s186, %s200
      %p202 = scmp.eq.s32.totalorder %s29, 0
      %p203 = por %p201, %p202
      %s205 = sadd.s32 %s204, 1
      %p208 = scmp.eq.s32.totalorder %s23, 1
      %p209 = scmp.ne.s32.totalorder %s204, %s206
      %p210 = scmp.eq.s32.totalorder %s23, 0
      %p211 = por %p209, %p210
      %p212 = scmp.ne.s32.totalorder %s204, %s206
      %p213 = scmp.eq.s32.totalorder %s28, 1
      %p214 = por %p212, %p213
      %p215 = scmp.ne.s32.totalorder %s206, %s207
      %p216 = scmp.eq.s32.totalorder %s28, 0
      %p217 = por %p215, %p216
      %p218 = scmp.ne.s32.totalorder %s206, %s207
      %p219 = scmp.eq.s32.totalorder %s29, 1
      %p220 = por %p218, %p219
      %p222 = scmp.ne.s32.totalorder %s207, %s221
      %p223 = scmp.eq.s32.totalorder %s29, 0
      %p224 = por %p222, %p223
      %s226 = sadd.s32 %s225, 1
      %p229 = scmp.eq.s32.totalorder %s23, 1
      %p230 = scmp.ne.s32.totalorder %s225, %s227
      %p231 = scmp.eq.s32.totalorder %s23, 0
      %p232 = por %p230, %p231
      %p233 = scmp.ne.s32.totalorder %s225, %s227
      %p234 = scmp.eq.s32.totalorder %s28, 1
      %p235 = por %p233, %p234
      %p236 = scmp.ne.s32.totalorder %s227, %s228
      %p237 = scmp.eq.s32.totalorder %s28, 0
      %p238 = por %p236, %p237
      %p239 = scmp.ne.s32.totalorder %s227, %s228
      %p240 = scmp.eq.s32.totalorder %s29, 1
      %p241 = por %p239, %p240
      %p243 = scmp.ne.s32.totalorder %s228, %s242
      %p244 = scmp.eq.s32.totalorder %s29, 0
      %p245 = por %p243, %p244
      %s247 = sadd.s32 %s246, 1
      %p250 = scmp.eq.s32.totalorder %s23, 1
      %p251 = scmp.ne.s32.totalorder %s246, %s248
      %p252 = scmp.eq.s32.totalorder %s23, 0
      %p253 = por %p251, %p252
      %p254 = scmp.ne.s32.totalorder %s246, %s248
      %p255 = scmp.eq.s32.totalorder %s28, 1
      %p256 = por %p254, %p255
      %p257 = scmp.ne.s32.totalorder %s248, %s249
      %p258 = scmp.eq.s32.totalorder %s28, 0
      %p259 = por %p257, %p258
      %p260 = scmp.ne.s32.totalorder %s248, %s249
      %p261 = scmp.eq.s32.totalorder %s29, 1
      %p262 = por %p260, %p261
      %p264 = scmp.ne.s32.totalorder %s249, %s263
      %p265 = scmp.eq.s32.totalorder %s29, 0
      %p266 = por %p264, %p265
      %s268 = sadd.s32 %s267, 1
      %p271 = scmp.eq.s32.totalorder %s23, 1
      %p272 = scmp.ne.s32.totalorder %s267, %s269
      %p273 = scmp.eq.s32.totalorder %s23, 0
      %p274 = por %p272, %p273
      %p275 = scmp.ne.s32.totalorder %s267, %s269
      %p276 = scmp.eq.s32.totalorder %s28, 1
      %p277 = por %p275, %p276
      %p278 = scmp.ne.s32.totalorder %s269, %s270
      %p279 = scmp.eq.s32.totalorder %s28, 0
      %p280 = por %p278, %p279
      %p281 = scmp.ne.s32.totalorder %s269, %s270
      %p282 = scmp.eq.s32.totalorder %s29, 1
      %p283 = por %p281, %p282
      %p285 = scmp.ne.s32.totalorder %s270, %s284
      %p286 = scmp.eq.s32.totalorder %s29, 0
      %p287 = por %p285, %p286
      %s289 = sadd.s32 %s288, 1
      %p292 = scmp.eq.s32.totalorder %s23, 1
      %p293 = scmp.ne.s32.totalorder %s288, %s290
      %p294 = scmp.eq.s32.totalorder %s23, 0
      %p295 = por %p293, %p294
      %p296 = scmp.ne.s32.totalorder %s288, %s290
      %p297 = scmp.eq.s32.totalorder %s28, 1
      %p298 = por %p296, %p297
      %p299 = scmp.ne.s32.totalorder %s290, %s291
      %p300 = scmp.eq.s32.totalorder %s28, 0
      %p301 = por %p299, %p300
      %p302 = scmp.ne.s32.totalorder %s290, %s291
      %p303 = scmp.eq.s32.totalorder %s29, 1
      %p304 = por %p302, %p303
      %p306 = scmp.ne.s32.totalorder %s291, %s305
      %p307 = scmp.eq.s32.totalorder %s29, 0
      %p308 = por %p306, %p307
      %s310 = sadd.s32 %s309, 1
      %p313 = scmp.eq.s32.totalorder %s23, 1
      %p314 = scmp.ne.s32.totalorder %s309, %s311
      %p315 = scmp.eq.s32.totalorder %s23, 0
      %p316 = por %p314, %p315
      %p317 = scmp.ne.s32.totalorder %s309, %s311
      %p318 = scmp.eq.s32.totalorder %s28, 1
      %p319 = por %p317, %p318
      %p320 = scmp.ne.s32.totalorder %s311, %s312
      %p321 = scmp.eq.s32.totalorder %s28, 0
      %p322 = por %p320, %p321
      %p323 = scmp.ne.s32.totalorder %s311, %s312
      %p324 = scmp.eq.s32.totalorder %s29, 1
      %p325 = por %p323, %p324
      %p327 = scmp.ne.s32.totalorder %s312, %s326
      %p328 = scmp.eq.s32.totalorder %s29, 0
      %p329 = por %p327, %p328
      %s330 = ssub.s32 %s23, %s30
      %p331 = scmp.eq.s32.totalorder %s330, 0
      %s333 = sadd.s32 %s332, 1
      %s334 = scalar_select %p331, %s332, %s333
      %p337 = pneg %p331
      %p338 = scmp.eq.s32.totalorder %s23, 1
      %p339 = por %p337, %p338
      %p340 = scmp.ne.s32.totalorder %s332, %s335
      %p341 = scmp.eq.s32.totalorder %s23, 0
      %p342 = por %p340, %p341
      %p343 = scmp.ne.s32.totalorder %s332, %s335
      %p344 = scmp.eq.s32.totalorder %s28, 1
      %p345 = por %p343, %p344
      %p346 = scmp.ne.s32.totalorder %s335, %s336
      %p347 = scmp.eq.s32.totalorder %s28, 0
      %p348 = por %p346, %p347
      %p349 = scmp.ne.s32.totalorder %s335, %s336
      %p350 = scmp.eq.s32.totalorder %s29, 1
      %p351 = por %p349, %p350
      %p353 = scmp.ne.s32.totalorder %s336, %s352
      %p354 = scmp.eq.s32.totalorder %s29, 0
      %p355 = por %p353, %p354
      %p356 = scmp.le.s32.totalorder 1, %s23
      %p357 = scmp.lt.s32.totalorder %s23, 3
      %p358 = pnand %p356, %p357
      %p359 = pneg %p358
      // Predicated region
      $region9: #{encoder_forward.1} parent=5 // pred_check
        _
      $region10: #{encoder_forward.1} parent=5 // pred_check_branch
        %361 = sbr.rel (%p358) target = $region12
      $region11: #{encoder_forward.1} parent=5 // pred_region
        %s362 = ssub.s32 %s23, 1
        // Predicated region
        $region13: #{encoder_forward.1} parent=11 // pred_check
          %p363 = pneg %p70
        $region14: #{encoder_forward.1} parent=11 // pred_check_branch
          %365 = sbr.rel (%p363) target = $region16
        $region15: #{encoder_forward.1} parent=11 // pred_region
          _
        $region16: #{encoder_forward.1} parent=11 // pred_fallthru
          _
        // Predicated region
        $region17: #{encoder_forward.1} parent=11 // pred_check
          %p366 = pneg %p91
        $region18: #{encoder_forward.1} parent=11 // pred_check_branch
          %368 = sbr.rel (%p366) target = $region20
        $region19: #{encoder_forward.1} parent=11 // pred_region
          _
        $region20: #{encoder_forward.1} parent=11 // pred_fallthru
          _
        // Predicated region
        $region21: #{encoder_forward.1} parent=11 // pred_check
          %p369 = pneg %p112
        $region22: #{encoder_forward.1} parent=11 // pred_check_branch
          %371 = sbr.rel (%p369) target = $region24
        $region23: #{encoder_forward.1} parent=11 // pred_region
          _
        $region24: #{encoder_forward.1} parent=11 // pred_fallthru
          _
        // Predicated region
        $region25: #{encoder_forward.1} parent=11 // pred_check
          %p372 = pneg %p133
        $region26: #{encoder_forward.1} parent=11 // pred_check_branch
          %374 = sbr.rel (%p372) target = $region28
        $region27: #{encoder_forward.1} parent=11 // pred_region
          _
        $region28: #{encoder_forward.1} parent=11 // pred_fallthru
          _
        // Predicated region
        $region29: #{encoder_forward.1} parent=11 // pred_check
          %p375 = pneg %p154
        $region30: #{encoder_forward.1} parent=11 // pred_check_branch
          %377 = sbr.rel (%p375) target = $region32
        $region31: #{encoder_forward.1} parent=11 // pred_region
          _
        $region32: #{encoder_forward.1} parent=11 // pred_fallthru
          _
        // Predicated region
        $region33: #{encoder_forward.1} parent=11 // pred_check
          %p378 = pneg %p175
        $region34: #{encoder_forward.1} parent=11 // pred_check_branch
          %380 = sbr.rel (%p378) target = $region36
        $region35: #{encoder_forward.1} parent=11 // pred_region
          _
        $region36: #{encoder_forward.1} parent=11 // pred_fallthru
          _
        // Predicated region
        $region37: #{encoder_forward.1} parent=11 // pred_check
          %p381 = pneg %p196
        $region38: #{encoder_forward.1} parent=11 // pred_check_branch
          %383 = sbr.rel (%p381) target = $region40
        $region39: #{encoder_forward.1} parent=11 // pred_region
          _
        $region40: #{encoder_forward.1} parent=11 // pred_fallthru
          _
        // Predicated region
        $region41: #{encoder_forward.1} parent=11 // pred_check
          %p384 = pneg %p217
        $region42: #{encoder_forward.1} parent=11 // pred_check_branch
          %386 = sbr.rel (%p384) target = $region44
        $region43: #{encoder_forward.1} parent=11 // pred_region
          _
        $region44: #{encoder_forward.1} parent=11 // pred_fallthru
          _
        // Predicated region
        $region45: #{encoder_forward.1} parent=11 // pred_check
          %p387 = pneg %p238
        $region46: #{encoder_forward.1} parent=11 // pred_check_branch
          %389 = sbr.rel (%p387) target = $region48
        $region47: #{encoder_forward.1} parent=11 // pred_region
          _
        $region48: #{encoder_forward.1} parent=11 // pred_fallthru
          _
        // Predicated region
        $region49: #{encoder_forward.1} parent=11 // pred_check
          %p390 = pneg %p259
        $region50: #{encoder_forward.1} parent=11 // pred_check_branch
          %392 = sbr.rel (%p390) target = $region52
        $region51: #{encoder_forward.1} parent=11 // pred_region
          _
        $region52: #{encoder_forward.1} parent=11 // pred_fallthru
          _
        // Predicated region
        $region53: #{encoder_forward.1} parent=11 // pred_check
          %p393 = pneg %p280
        $region54: #{encoder_forward.1} parent=11 // pred_check_branch
          %395 = sbr.rel (%p393) target = $region56
        $region55: #{encoder_forward.1} parent=11 // pred_region
          _
        $region56: #{encoder_forward.1} parent=11 // pred_fallthru
          _
        // Predicated region
        $region57: #{encoder_forward.1} parent=11 // pred_check
          %p396 = pneg %p301
        $region58: #{encoder_forward.1} parent=11 // pred_check_branch
          %398 = sbr.rel (%p396) target = $region60
        $region59: #{encoder_forward.1} parent=11 // pred_region
          _
        $region60: #{encoder_forward.1} parent=11 // pred_fallthru
          _
        // Predicated region
        $region61: #{encoder_forward.1} parent=11 // pred_check
          %p399 = pneg %p322
        $region62: #{encoder_forward.1} parent=11 // pred_check_branch
          %401 = sbr.rel (%p399) target = $region64
        $region63: #{encoder_forward.1} parent=11 // pred_region
          _
        $region64: #{encoder_forward.1} parent=11 // pred_fallthru
          _
      $region12: #{encoder_forward.1} parent=5 // pred_fallthru
        _
      %p402 = scmp.lt.s32.totalorder %s23, 2
      // Predicated region
      $region65: #{encoder_forward.1} parent=5 // pred_check
        %p403 = pneg %p402
      $region66: #{encoder_forward.1} parent=5 // pred_check_branch
        %405 = sbr.rel (%p403) target = $region68
      $region67: #{encoder_forward.1} parent=5 // pred_region
        // Predicated region
        $region69: #{encoder_forward.1} parent=67 // pred_check
          %p406 = pneg %p43
        $region70: #{encoder_forward.1} parent=67 // pred_check_branch
          %408 = sbr.rel (%p406) target = $region72
        $region71: #{encoder_forward.1} parent=67 // pred_region
          %p409 = scmp.lt.s32.totalorder %s23, 1
          %s410 = scalar_select %p409, %s23, 1
          %s411 = smul.addr %s410, 18
          %s412 = smul.addr %s411, 8
          %s413 = scalar_lea.vmem %s0, %s412
        $region72: #{encoder_forward.1} parent=67 // pred_fallthru
          _
      $region68: #{encoder_forward.1} parent=5 // pred_fallthru
        _
      %p414 = scmp.le.s32.totalorder 1, %s23
      %p415 = scmp.lt.s32.totalorder %s23, 3
      %p416 = pnand %p414, %p415
      %p417 = pneg %p416
      // Predicated region
      $region73: #{encoder_forward.1} parent=5 // pred_check
        _
      $region74: #{encoder_forward.1} parent=5 // pred_check_branch
        %419 = sbr.rel (%p416) target = $region76
      $region75: #{encoder_forward.1} parent=5 // pred_region
        %s420 = ssub.s32 %s23, 1
        %p421 = scmp.lt.s32.totalorder %s28, 1
        %s422 = scalar_select %p421, %s28, 1
        %s423 = smul.addr %s422, 18
        %s424 = smul.addr %s423, 8
        %s425 = scalar_lea.vmem %s0, %s424
        %p426 = pneg %p49
        %p427 = pneg %p46
        %p428 = pneg %p70
        %p429 = pneg %p67
        %p430 = pneg %p91
        %p431 = pneg %p88
        %p432 = pneg %p112
        %p433 = pneg %p109
        %p434 = pneg %p133
        %p435 = pneg %p130
        %p436 = pneg %p154
        %p437 = pneg %p151
        %p438 = pneg %p175
        %p439 = pneg %p172
        %p440 = pneg %p196
        %p441 = pneg %p193
        %p442 = pneg %p217
        %p443 = pneg %p214
        %p444 = pneg %p238
        %p445 = pneg %p235
        %p446 = pneg %p259
        %p447 = pneg %p256
        %p448 = pneg %p280
        %p449 = pneg %p277
        %p450 = pneg %p301
        %p451 = pneg %p298
        %p452 = pneg %p322
        %p453 = pneg %p319
        %p454 = pneg %p348
        %p455 = pneg %p345
        %s456 = sand.u32 %s335, 1
        %s457 = scalar_lea.sflag [#allocation4], %s456
        %s458 = sand.u32 %s335, 1
        %s459 = scalar_lea.vmem [#allocation3], %s458
        %p460 = scmp.lt.s32.totalorder %s28, 1
        %s461 = scalar_select %p460, %s28, 1
        %s462 = smul.addr %s461, 18
        %s463 = smul.addr %s462, 8
        %s464 = scalar_lea.vmem %s0, %s463
        %v466 = vld [vmem:[%s464] sm:$0xff]
        %v467 = vld [vmem:[%s464 + $0x10] sm:$0xff]
        %v468 = vld [vmem:[%s464 + $0x20] sm:$0xff]
        %v469 = vld [vmem:[%s464 + $0x30] sm:$0xff]
        %v470 = vld [vmem:[%s464 + $0x40] sm:$0xff]
        %v471 = vld [vmem:[%s464 + $0x50] sm:$0xff]
        %v472 = vld [vmem:[%s464 + $0x60] sm:$0xff]
        %v473 = vld [vmem:[%s464 + $0x70] sm:$0xff]
        %v474 = vpack.c.bf16 %v467, %v466
        %v475 = vpack.c.bf16 %v469, %v468
        %v476 = vpack.c.bf16 %v471, %v470
        %v477 = vpack.c.bf16 %v473, %v472
        %v478 = vld [vmem:[%s1] sm:$0xf]
        %v479 = vld [vmem:[%s1 + $0x4] sm:$0x3]
        %v480 = vld [vmem:[%s464 + $0x1] sm:$0xff]
        %v481 = vld [vmem:[%s464 + $0x11] sm:$0xff]
        %v482 = vld [vmem:[%s464 + $0x21] sm:$0xff]
        %v483 = vld [vmem:[%s464 + $0x31] sm:$0xff]
        %v484 = vld [vmem:[%s464 + $0x41] sm:$0xff]
        %v485 = vld [vmem:[%s464 + $0x51] sm:$0xff]
        %v486 = vld [vmem:[%s464 + $0x61] sm:$0xff]
        %v487 = vld [vmem:[%s464 + $0x71] sm:$0xff]
        %v488 = vpack.c.bf16 %v481, %v480
        %v489 = vpack.c.bf16 %v483, %v482
        %v490 = vpack.c.bf16 %v485, %v484
        %v491 = vpack.c.bf16 %v487, %v486
        %s492 = scalar_lea.vmem %s1, 8
        %v493 = vld [vmem:[%s492] sm:$0xf]
        %v494 = vld [vmem:[%s492 + $0x4] sm:$0x3]
        %v497 = vunpack.c.l.b16 %v493
        %v498 = vunpack.c.l.b16 %v494
        %v499 = vpack.c.b16 %v498, %v497
        %vm500 = vcmask 97280
        %v502 = vsel %vm500, %v488, 0
        %v505 = vsel %vm500, %v489, 0
        %v508 = vsel %vm500, %v490, 0
        %v511 = vsel %vm500, %v491, 0
        %vm513 = vcmask 1045504
        %v515 = vsel %vm513, %v499, 0
        %517 = vmatprep.subr.bf16.mxu0 0
        %518 = vmatpush1.bf16.msra.mxu0 %v515
        %519 = vmatprep.subr.bf16.mxu0 0
        %520 = vmatpush1.bf16.msra.mxu0 0
        %521 = vmatprep.subr.bf16.mxu0 0
        %522 = vmatpush1.bf16.msra.mxu0 0
        %523 = vmatprep.subr.bf16.mxu0 0
        %524 = vmatpush1.bf16.msra.mxu0 0
        %525 = vmatprep.subr.bf16.mxu0 0
        %526 = vmatpush1.bf16.msra.mxu0 0
        %527 = vmatprep.subr.bf16.mxu0 0
        %528 = vmatpush1.bf16.msra.mxu0 0
        %529 = vmatprep.subr.bf16.mxu0 0
        %530 = vmatpush1.bf16.msra.mxu0 0
        %531 = vmatprep.subr.bf16.mxu0 0
        %532 = vmatpush1.bf16.msra.mxu0 0
        %533 = vmatprep.subr.bf16.mxu0 0
        %534 = vmatpush1.bf16.msra.mxu0 0
        %535 = vmatprep.subr.bf16.mxu0 0
        %536 = vmatpush1.bf16.msra.mxu0 0
        %537 = vmatprep.subr.bf16.mxu0 0
        %538 = vmatpush1.bf16.msra.mxu0 0
        %539 = vmatprep.subr.bf16.mxu0 0
        %540 = vmatpush1.bf16.msra.mxu0 0
        %541 = vmatprep.subr.bf16.mxu0 0
        %542 = vmatpush1.bf16.msra.mxu0 0
        %543 = vmatprep.subr.bf16.mxu0 0
        %544 = vmatpush1.bf16.msra.mxu0 0
        %545 = vmatprep.subr.bf16.mxu0 0
        %546 = vmatpush1.bf16.msra.mxu0 0
        %547 = vmatprep.subr.bf16.mxu0 0
        %548 = vmatpush1.bf16.msra.mxu0 0
        %549 = vmatprep.mubr.bf16.mxu0 0
        %550 = vmatmul.mubr.bf16.gmra.mrb[0].mxu0 %v502
        %v551 = vpop.f32.mrb[0].mxu0
        %v552 = vadd.f32 0.0, %v551
        %v553 = vpop.f32.mrb[0].mxu0
        %v554 = vpop.f32.mrb[0].mxu0
        %v555 = vadd.f32 0.0, %v554
        %v556 = vpop.f32.mrb[0].mxu0
        %557 = vmatprep.mubr.bf16.mxu0 0
        %558 = vmatmul.mubr.bf16.gmra.mrb[0].mxu0 %v505
        %v559 = vpop.f32.mrb[0].mxu0
        %v560 = vadd.f32 0.0, %v559
        %v561 = vpop.f32.mrb[0].mxu0
        %v562 = vpop.f32.mrb[0].mxu0
        %v563 = vadd.f32 0.0, %v562
        %v564 = vpop.f32.mrb[0].mxu0
        %565 = vmatprep.mubr.bf16.mxu0 0
        %566 = vmatmul.mubr.bf16.gmra.mrb[0].mxu0 %v508
        %v567 = vpop.f32.mrb[0].mxu0
        %v568 = vadd.f32 0.0, %v567
        %v569 = vpop.f32.mrb[0].mxu0
        %v570 = vpop.f32.mrb[0].mxu0
        %v571 = vadd.f32 0.0, %v570
        %v572 = vpop.f32.mrb[0].mxu0
        %573 = vmatprep.mubr.bf16.mxu0 0
        %574 = vmatmul.mubr.bf16.gmra.mrb[0].mxu0 %v511
        %v575 = vpop.f32.mrb[0].mxu0
        %v576 = vadd.f32 0.0, %v575
        %v577 = vpop.f32.mrb[0].mxu0
        %v578 = vpop.f32.mrb[0].mxu0
        %v579 = vadd.f32 0.0, %v578
        %v580 = vpop.f32.mrb[0].mxu0
        %581 = vdwg.mxu0
        %v584 = vunpack.c.l.b16 %v478
        %v585 = vunpack.c.l.b16 %v479
        %v586 = vpack.c.b16 %v585, %v584
        %v588 = vsel %vm500, %v474, 0
        %v591 = vsel %vm500, %v475, 0
        %v594 = vsel %vm500, %v476, 0
        %v597 = vsel %vm500, %v477, 0
        %v600 = vsel %vm513, %v586, 0
        %602 = vmatprep.subr.bf16.mxu0 0
        %603 = vmatpush1.bf16.msra.mxu0 %v600
        %604 = vmatprep.subr.bf16.mxu0 0
        %605 = vmatpush1.bf16.msra.mxu0 0
        %606 = vmatprep.subr.bf16.mxu0 0
        %607 = vmatpush1.bf16.msra.mxu0 0
        %608 = vmatprep.subr.bf16.mxu0 0
        %609 = vmatpush1.bf16.msra.mxu0 0
        %610 = vmatprep.subr.bf16.mxu0 0
        %611 = vmatpush1.bf16.msra.mxu0 0
        %612 = vmatprep.subr.bf16.mxu0 0
        %613 = vmatpush1.bf16.msra.mxu0 0
        %614 = vmatprep.subr.bf16.mxu0 0
        %615 = vmatpush1.bf16.msra.mxu0 0
        %616 = vmatprep.subr.bf16.mxu0 0
        %617 = vmatpush1.bf16.msra.mxu0 0
        %618 = vmatprep.subr.bf16.mxu0 0
        %619 = vmatpush1.bf16.msra.mxu0 0
        %620 = vmatprep.subr.bf16.mxu0 0
        %621 = vmatpush1.bf16.msra.mxu0 0
        %622 = vmatprep.subr.bf16.mxu0 0
        %623 = vmatpush1.bf16.msra.mxu0 0
        %624 = vmatprep.subr.bf16.mxu0 0
        %625 = vmatpush1.bf16.msra.mxu0 0
        %626 = vmatprep.subr.bf16.mxu0 0
        %627 = vmatpush1.bf16.msra.mxu0 0
        %628 = vmatprep.subr.bf16.mxu0 0
        %629 = vmatpush1.bf16.msra.mxu0 0
        %630 = vmatprep.subr.bf16.mxu0 0
        %631 = vmatpush1.bf16.msra.mxu0 0
        %632 = vmatprep.subr.bf16.mxu0 0
        %633 = vmatpush1.bf16.msra.mxu0 0
        %634 = vmatprep.mubr.bf16.mxu0 0
        %635 = vmatmul.mubr.bf16.gmra.mrb[0].mxu0 %v588
        %v636 = vpop.f32.mrb[0].mxu0
        %v637 = vadd.f32 %v552, %v636
        %v638 = vpop.f32.mrb[0].mxu0
        %v639 = vpop.f32.mrb[0].mxu0
        %v640 = vadd.f32 %v555, %v639
        %v641 = vpop.f32.mrb[0].mxu0
        %642 = vmatprep.mubr.bf16.mxu0 0
        %643 = vmatmul.mubr.bf16.gmra.mrb[0].mxu0 %v591
        %v644 = vpop.f32.mrb[0].mxu0
        %v645 = vadd.f32 %v560, %v644
        %v646 = vpop.f32.mrb[0].mxu0
        %v647 = vpop.f32.mrb[0].mxu0
        %v648 = vadd.f32 %v563, %v647
        %v649 = vpop.f32.mrb[0].mxu0
        %650 = vmatprep.mubr.bf16.mxu0 0
        %651 = vmatmul.mubr.bf16.gmra.mrb[0].mxu0 %v594
        %v652 = vpop.f32.mrb[0].mxu0
        %v653 = vadd.f32 %v568, %v652
        %v654 = vpop.f32.mrb[0].mxu0
        %v655 = vpop.f32.mrb[0].mxu0
        %v656 = vadd.f32 %v571, %v655
        %v657 = vpop.f32.mrb[0].mxu0
        %658 = vmatprep.mubr.bf16.mxu0 0
        %659 = vmatmul.mubr.bf16.gmra.mrb[0].mxu0 %v597
        %v660 = vpop.f32.mrb[0].mxu0
        %v661 = vadd.f32 %v576, %v660
        %v662 = vpop.f32.mrb[0].mxu0
        %v663 = vpop.f32.mrb[0].mxu0
        %v664 = vadd.f32 %v579, %v663
        %v665 = vpop.f32.mrb[0].mxu0
        %666 = vdwg.mxu0
        %s667 = scalar_lea.vmem %s464, 16
        %v668 = vld [vmem:[%s667] sm:$0xff]
        %v669 = vld [vmem:[%s667 + $0x10] sm:$0xff]
        %v670 = vld [vmem:[%s667 + $0x20] sm:$0xff]
        %v671 = vld [vmem:[%s667 + $0x30] sm:$0xff]
        %v672 = vld [vmem:[%s667 + $0x40] sm:$0xff]
        %v673 = vld [vmem:[%s667 + $0x50] sm:$0xff]
        %v674 = vld [vmem:[%s667 + $0x60] sm:$0xff]
        %v675 = vld [vmem:[%s667 + $0x70] sm:$0xff]
        %v676 = vpack.c.bf16 %v669, %v668
        %v677 = vpack.c.bf16 %v671, %v670
        %v678 = vpack.c.bf16 %v673, %v672
        %v679 = vpack.c.bf16 %v675, %v674
        %s680 = scalar_lea.vmem %s1, 16
        %v681 = vld [vmem:[%s680] sm:$0xf]
        %v682 = vld [vmem:[%s680 + $0x4] sm:$0x3]
        %v685 = vunpack.c.l.b16 %v681
        %v686 = vunpack.c.l.b16 %v682
        %v687 = vpack.c.b16 %v686, %v685
        %v689 = vsel %vm500, %v676, 0
        %v692 = vsel %vm500, %v677, 0
        %v695 = vsel %vm500, %v678, 0
        %v698 = vsel %vm500, %v679, 0
        %v701 = vsel %vm513, %v687, 0
        %703 = vmatprep.subr.bf16.mxu0 0
        %704 = vmatpush1.bf16.msra.mxu0 %v701
        %705 = vmatprep.subr.bf16.mxu0 0
        %706 = vmatpush1.bf16.msra.mxu0 0
        %707 = vmatprep.subr.bf16.mxu0 0
        %708 = vmatpush1.bf16.msra.mxu0 0
        %709 = vmatprep.subr.bf16.mxu0 0
        %710 = vmatpush1.bf16.msra.mxu0 0
        %711 = vmatprep.subr.bf16.mxu0 0
        %712 = vmatpush1.bf16.msra.mxu0 0
        %713 = vmatprep.subr.bf16.mxu0 0
        %714 = vmatpush1.bf16.msra.mxu0 0
        %715 = vmatprep.subr.bf16.mxu0 0
        %716 = vmatpush1.bf16.msra.mxu0 0
        %717 = vmatprep.subr.bf16.mxu0 0
        %718 = vmatpush1.bf16.msra.mxu0 0
        %719 = vmatprep.subr.bf16.mxu0 0
        %720 = vmatpush1.bf16.msra.mxu0 0
        %721 = vmatprep.subr.bf16.mxu0 0
        %722 = vmatpush1.bf16.msra.mxu0 0
        %723 = vmatprep.subr.bf16.mxu0 0
        %724 = vmatpush1.bf16.msra.mxu0 0
        %725 = vmatprep.subr.bf16.mxu0 0
        %726 = vmatpush1.bf16.msra.mxu0 0
        %727 = vmatprep.subr.bf16.mxu0 0
        %728 = vmatpush1.bf16.msra.mxu0 0
        %729 = vmatprep.subr.bf16.mxu0 0
        %730 = vmatpush1.bf16.msra.mxu0 0
        %731 = vmatprep.subr.bf16.mxu0 0
        %732 = vmatpush1.bf16.msra.mxu0 0
        %733 = vmatprep.subr.bf16.mxu0 0
        %734 = vmatpush1.bf16.msra.mxu0 0
        %735 = vmatprep.mubr.bf16.mxu0 0
        %736 = vmatmul.mubr.bf16.gmra.mrb[0].mxu0 %v689
        %v737 = vpop.f32.mrb[0].mxu0
        %v738 = vadd.f32 0.0, %v737
        %v739 = vpop.f32.mrb[0].mxu0
        %v740 = vpop.f32.mrb[0].mxu0
        %v741 = vadd.f32 0.0, %v740
        %v742 = vpop.f32.mrb[0].mxu0
        %743 = vmatprep.mubr.bf16.mxu0 0
        %744 = vmatmul.mubr.bf16.gmra.mrb[0].mxu0 %v692
        %v745 = vpop.f32.mrb[0].mxu0
        %v746 = vadd.f32 0.0, %v745
        %v747 = vpop.f32.mrb[0].mxu0
        %v748 = vpop.f32.mrb[0].mxu0
        %v749 = vadd.f32 0.0, %v748
        %v750 = vpop.f32.mrb[0].mxu0
        %751 = vmatprep.mubr.bf16.mxu0 0
        %752 = vmatmul.mubr.bf16.gmra.mrb[0].mxu0 %v695
        %v753 = vpop.f32.mrb[0].mxu0
        %v754 = vadd.f32 0.0, %v753
        %v755 = vpop.f32.mrb[0].mxu0
        %v756 = vpop.f32.mrb[0].mxu0
        %v757 = vadd.f32 0.0, %v756
        %v758 = vpop.f32.mrb[0].mxu0
        %759 = vmatprep.mubr.bf16.mxu0 0
        %760 = vmatmul.mubr.bf16.gmra.mrb[0].mxu0 %v698
        %v761 = vpop.f32.mrb[0].mxu0
        %v762 = vadd.f32 0.0, %v761
        %v763 = vpop.f32.mrb[0].mxu0
        %v764 = vpop.f32.mrb[0].mxu0
        %v765 = vadd.f32 0.0, %v764
        %v766 = vpop.f32.mrb[0].mxu0
        %767 = vdwg.mxu0
        %v768 = vadd.f32 %v637, %v738
        %v769 = vadd.f32 %v640, %v741
        %v770 = vadd.f32 %v645, %v746
        %v771 = vadd.f32 %v648, %v749
        %v772 = vadd.f32 %v653, %v754
        %v773 = vadd.f32 %v656, %v757
        %v774 = vadd.f32 %v661, %v762
        %v775 = vadd.f32 %v664, %v765
        %v776 = vld [vmem:[%s667 + $0x1] sm:$0xff]
        %v777 = vld [vmem:[%s667 + $0x11] sm:$0xff]
        %v778 = vld [vmem:[%s667 + $0x21] sm:$0xff]
        %v779 = vld [vmem:[%s667 + $0x31] sm:$0xff]
        %v780 = vld [vmem:[%s667 + $0x41] sm:$0xff]
        %v781 = vld [vmem:[%s667 + $0x51] sm:$0xff]
        %v782 = vld [vmem:[%s667 + $0x61] sm:$0xff]
        %v783 = vld [vmem:[%s667 + $0x71] sm:$0xff]
        %v784 = vpack.c.bf16 %v777, %v776
        %v785 = vpack.c.bf16 %v779, %v778
        %v786 = vpack.c.bf16 %v781, %v780
        %v787 = vpack.c.bf16 %v783, %v782
        %s788 = scalar_lea.vmem %s1, 24
        %v789 = vld [vmem:[%s788] sm:$0xf]
        %v790 = vld [vmem:[%s788 + $0x4] sm:$0x3]
        %v793 = vunpack.c.l.b16 %v789
        %v794 = vunpack.c.l.b16 %v790
        %v795 = vpack.c.b16 %v794, %v793
        %v797 = vsel %vm500, %v784, 0
        %v800 = vsel %vm500, %v785, 0
        %v803 = vsel %vm500, %v786, 0
        %v806 = vsel %vm500, %v787, 0
        %v809 = vsel %vm513, %v795, 0
        %811 = vmatprep.subr.bf16.mxu0 0
        %812 = vmatpush1.bf16.msra.mxu0 %v809
        %813 = vmatprep.subr.bf16.mxu0 0
        %814 = vmatpush1.bf16.msra.mxu0 0
        %815 = vmatprep.subr.bf16.mxu0 0
        %816 = vmatpush1.bf16.msra.mxu0 0
        %817 = vmatprep.subr.bf16.mxu0 0
        %818 = vmatpush1.bf16.msra.mxu0 0
        %819 = vmatprep.subr.bf16.mxu0 0
        %820 = vmatpush1.bf16.msra.mxu0 0
        %821 = vmatprep.subr.bf16.mxu0 0
        %822 = vmatpush1.bf16.msra.mxu0 0
        %823 = vmatprep.subr.bf16.mxu0 0
        %824 = vmatpush1.bf16.msra.mxu0 0
        %825 = vmatprep.subr.bf16.mxu0 0
        %826 = vmatpush1.bf16.msra.mxu0 0
        %827 = vmatprep.subr.bf16.mxu0 0
        %828 = vmatpush1.bf16.msra.mxu0 0
        %829 = vmatprep.subr.bf16.mxu0 0
        %830 = vmatpush1.bf16.msra.mxu0 0
        %831 = vmatprep.subr.bf16.mxu0 0
        %832 = vmatpush1.bf16.msra.mxu0 0
        %833 = vmatprep.subr.bf16.mxu0 0
        %834 = vmatpush1.bf16.msra.mxu0 0
        %835 = vmatprep.subr.bf16.mxu0 0
        %836 = vmatpush1.bf16.msra.mxu0 0
        %837 = vmatprep.subr.bf16.mxu0 0
        %838 = vmatpush1.bf16.msra.mxu0 0
        %839 = vmatprep.subr.bf16.mxu0 0
        %840 = vmatpush1.bf16.msra.mxu0 0
        %841 = vmatprep.subr.bf16.mxu0 0
        %842 = vmatpush1.bf16.msra.mxu0 0
        %843 = vmatprep.mubr.bf16.mxu0 0
        %844 = vmatmul.mubr.bf16.gmra.mrb[0].mxu0 %v797
        %v845 = vpop.f32.mrb[0].mxu0
        %v846 = vadd.f32 0.0, %v845
        %v847 = vpop.f32.mrb[0].mxu0
        %v848 = vpop.f32.mrb[0].mxu0
        %v849 = vadd.f32 0.0, %v848
        %v850 = vpop.f32.mrb[0].mxu0
        %851 = vmatprep.mubr.bf16.mxu0 0
        %852 = vmatmul.mubr.bf16.gmra.mrb[0].mxu0 %v800
        %v853 = vpop.f32.mrb[0].mxu0
        %v854 = vadd.f32 0.0, %v853
        %v855 = vpop.f32.mrb[0].mxu0
        %v856 = vpop.f32.mrb[0].mxu0
        %v857 = vadd.f32 0.0, %v856
        %v858 = vpop.f32.mrb[0].mxu0
        %859 = vmatprep.mubr.bf16.mxu0 0
        %860 = vmatmul.mubr.bf16.gmra.mrb[0].mxu0 %v803
        %v861 = vpop.f32.mrb[0].mxu0
        %v862 = vadd.f32 0.0, %v861
        %v863 = vpop.f32.mrb[0].mxu0
        %v864 = vpop.f32.mrb[0].mxu0
        %v865 = vadd.f32 0.0, %v864
        %v866 = vpop.f32.mrb[0].mxu0
        %867 = vmatprep.mubr.bf16.mxu0 0
        %868 = vmatmul.mubr.bf16.gmra.mrb[0].mxu0 %v806
        %v869 = vpop.f32.mrb[0].mxu0
        %v870 = vadd.f32 0.0, %v869
        %v871 = vpop.f32.mrb[0].mxu0
        %v872 = vpop.f32.mrb[0].mxu0
        %v873 = vadd.f32 0.0, %v872
        %v874 = vpop.f32.mrb[0].mxu0
        %875 = vdwg.mxu0
        %v876 = vadd.f32 %v768, %v846
        %v877 = vadd.f32 %v769, %v849
        %v878 = vadd.f32 %v770, %v854
        %v879 = vadd.f32 %v771, %v857
        %v880 = vadd.f32 %v772, %v862
        %v881 = vadd.f32 %v773, %v865
        %v882 = vadd.f32 %v774, %v870
        %v883 = vadd.f32 %v775, %v873
        %v884 = vld [vmem:[%s2] sm:$0x1]
        %v886 = vlaneseq
        %v887 = vshrl.u32 %v886, 7
        %v888 = vsub.s32 0, %v887
        %v889 = vrot.slane %v884, %v888
        %v891 = vadd.f32 %v876, %v889
        %v892 = vadd.f32 %v877, %v889
        %v893 = vadd.f32 %v878, %v889
        %v894 = vadd.f32 %v879, %v889
        %v895 = vadd.f32 %v880, %v889
        %v896 = vadd.f32 %v881, %v889
        %v897 = vadd.f32 %v882, %v889
        %v898 = vadd.f32 %v883, %v889
        %v899 = vxor.u32 %v891, 2147483648
        %v900 = vxor.u32 %v892, 2147483648
        %v901 = vxor.u32 %v893, 2147483648
        %v902 = vxor.u32 %v894, 2147483648
        %v903 = vxor.u32 %v895, 2147483648
        %v904 = vxor.u32 %v896, 2147483648
        %v905 = vxor.u32 %v897, 2147483648
        %v906 = vxor.u32 %v898, 2147483648
        %v907 = vmul.f32 %v899, 1.442695
        %v908 = vpow.pop %v907
        %v909 = vmul.f32 %v900, 1.442695
        %v910 = vpow.pop %v909
        %v911 = vmul.f32 %v901, 1.442695
        %v912 = vpow.pop %v911
        %v913 = vmul.f32 %v902, 1.442695
        %v914 = vpow.pop %v913
        %v915 = vmul.f32 %v903, 1.442695
        %v916 = vpow.pop %v915
        %v917 = vmul.f32 %v904, 1.442695
        %v918 = vpow.pop %v917
        %v919 = vmul.f32 %v905, 1.442695
        %v920 = vpow.pop %v919
        %v921 = vmul.f32 %v906, 1.442695
        %v922 = vpow.pop %v921
        %v923 = vadd.f32 %v908, 1.0
        %v924 = vadd.f32 %v910, 1.0
        %v925 = vadd.f32 %v912, 1.0
        %v926 = vadd.f32 %v914, 1.0
        %v927 = vadd.f32 %v916, 1.0
        %v928 = vadd.f32 %v918, 1.0
        %v929 = vadd.f32 %v920, 1.0
        %v930 = vadd.f32 %v922, 1.0
        %v931 = vrcp.pop %v923
        %v932 = vmul.f32 1.0, %v931
        %v933 = vrcp.pop %v924
        %v934 = vmul.f32 1.0, %v933
        %v935 = vrcp.pop %v925
        %v936 = vmul.f32 1.0, %v935
        %v937 = vrcp.pop %v926
        %v938 = vmul.f32 1.0, %v937
        %v939 = vrcp.pop %v927
        %v940 = vmul.f32 1.0, %v939
        %v941 = vrcp.pop %v928
        %v942 = vmul.f32 1.0, %v941
        %v943 = vrcp.pop %v929
        %v944 = vmul.f32 1.0, %v943
        %v945 = vrcp.pop %v930
        %v946 = vmul.f32 1.0, %v945
        %v947 = vmul.f32 %v891, %v932
        %v948 = vmul.f32 %v892, %v934
        %v949 = vmul.f32 %v893, %v936
        %v950 = vmul.f32 %v894, %v938
        %v951 = vmul.f32 %v895, %v940
        %v952 = vmul.f32 %v896, %v942
        %v953 = vmul.f32 %v897, %v944
        %v954 = vmul.f32 %v898, %v946
        %955 = vst [vmem:[#allocation2] sm:$0xff] 0.0
        %956 = vst [vmem:[#allocation2 + $0x8] sm:$0x3] 0.0
        %s957 = scalar_lea.vmem [#allocation2], 144
        %958 = vst [vmem:[%s957] sm:$0xff] 0.0
        %959 = vst [vmem:[%s957 + $0x8] sm:$0x3] 0.0
        %s960 = scalar_lea.vmem [#allocation2], 16
        %961 = vst [vmem:[%s960] sm:$0x1] 0.0
        %962 = vst [vmem:[%s960 + $0x10] sm:$0x1] 0.0
        %963 = vst [vmem:[%s960 + $0x20] sm:$0x1] 0.0
        %964 = vst [vmem:[%s960 + $0x30] sm:$0x1] 0.0
        %965 = vst [vmem:[%s960 + $0x40] sm:$0x1] 0.0
        %966 = vst [vmem:[%s960 + $0x50] sm:$0x1] 0.0
        %967 = vst [vmem:[%s960 + $0x60] sm:$0x1] 0.0
        %968 = vst [vmem:[%s960 + $0x70] sm:$0x1] 0.0
        %969 = vst [vmem:[%s960 + $0x9] sm:$0x1] 0.0
        %970 = vst [vmem:[%s960 + $0x19] sm:$0x1] 0.0
        %971 = vst [vmem:[%s960 + $0x29] sm:$0x1] 0.0
        %972 = vst [vmem:[%s960 + $0x39] sm:$0x1] 0.0
        %973 = vst [vmem:[%s960 + $0x49] sm:$0x1] 0.0
        %974 = vst [vmem:[%s960 + $0x59] sm:$0x1] 0.0
        %975 = vst [vmem:[%s960 + $0x69] sm:$0x1] 0.0
        %976 = vst [vmem:[%s960 + $0x79] sm:$0x1] 0.0
        %977 = vst [vmem:[%s960 + $0x1] sm:$0xff] %v947
        %978 = vst [vmem:[%s960 + $0x11] sm:$0xff] %v948
        %979 = vst [vmem:[%s960 + $0x21] sm:$0xff] %v949
        %980 = vst [vmem:[%s960 + $0x31] sm:$0xff] %v950
        %981 = vst [vmem:[%s960 + $0x41] sm:$0xff] %v951
        %982 = vst [vmem:[%s960 + $0x51] sm:$0xff] %v952
        %983 = vst [vmem:[%s960 + $0x61] sm:$0xff] %v953
        %984 = vst [vmem:[%s960 + $0x71] sm:$0xff] %v954
        %v985 = vld [vmem:[#allocation2] sm:$0xff]
        %v986 = vld [vmem:[#allocation2 + $0x10] sm:$0xff]
        %v987 = vld [vmem:[#allocation2 + $0x20] sm:$0xff]
        %v988 = vld [vmem:[#allocation2 + $0x30] sm:$0xff]
        %v989 = vld [vmem:[#allocation2 + $0x40] sm:$0xff]
        %v990 = vld [vmem:[#allocation2 + $0x50] sm:$0xff]
        %v991 = vld [vmem:[#allocation2 + $0x60] sm:$0xff]
        %v992 = vld [vmem:[#allocation2 + $0x70] sm:$0xff]
        %v993 = vld [vmem:[%s3] sm:$0x1]
        %v994 = vlaneseq
        %v995 = vshrl.u32 %v994, 7
        %v996 = vsub.s32 0, %v995
        %v997 = vrot.slane %v993, %v996
        %v998 = vmul.f32 %v985, %v997
        %v999 = vmul.f32 %v986, %v997
        %v1000 = vmul.f32 %v987, %v997
        %v1001 = vmul.f32 %v988, %v997
        %v1002 = vmul.f32 %v989, %v997
        %v1003 = vmul.f32 %v990, %v997
        %v1004 = vmul.f32 %v991, %v997
        %v1005 = vmul.f32 %v992, %v997
        %v1006 = vadd.f32 %v998, 0.0
        %v1007 = vadd.f32 %v999, 0.0
        %v1008 = vadd.f32 %v1000, 0.0
        %v1009 = vadd.f32 %v1001, 0.0
        %v1010 = vadd.f32 %v1002, 0.0
        %v1011 = vadd.f32 %v1003, 0.0
        %v1012 = vadd.f32 %v1004, 0.0
        %v1013 = vadd.f32 %v1005, 0.0
        %v1014 = vld [vmem:[#allocation2 + $0x1] sm:$0xff]
        %v1015 = vld [vmem:[#allocation2 + $0x11] sm:$0xff]
        %v1016 = vld [vmem:[#allocation2 + $0x21] sm:$0xff]
        %v1017 = vld [vmem:[#allocation2 + $0x31] sm:$0xff]
        %v1018 = vld [vmem:[#allocation2 + $0x41] sm:$0xff]
        %v1019 = vld [vmem:[#allocation2 + $0x51] sm:$0xff]
        %v1020 = vld [vmem:[#allocation2 + $0x61] sm:$0xff]
        %v1021 = vld [vmem:[#allocation2 + $0x71] sm:$0xff]
        %v1022 = vld [vmem:[%s3 + $0x1] sm:$0x1]
        %v1023 = vlaneseq
        %v1024 = vshrl.u32 %v1023, 7
        %v1025 = vsub.s32 0, %v1024
        %v1026 = vrot.slane %v1022, %v1025
        %v1027 = vmul.f32 %v1014, %v1026
        %v1028 = vmul.f32 %v1015, %v1026
        %v1029 = vmul.f32 %v1016, %v1026
        %v1030 = vmul.f32 %v1017, %v1026
        %v1031 = vmul.f32 %v1018, %v1026
        %v1032 = vmul.f32 %v1019, %v1026
        %v1033 = vmul.f32 %v1020, %v1026
        %v1034 = vmul.f32 %v1021, %v1026
        %v1035 = vadd.f32 %v1006, %v1027
        %v1036 = vadd.f32 %v1007, %v1028
        %v1037 = vadd.f32 %v1008, %v1029
        %v1038 = vadd.f32 %v1009, %v1030
        %v1039 = vadd.f32 %v1010, %v1031
        %v1040 = vadd.f32 %v1011, %v1032
        %v1041 = vadd.f32 %v1012, %v1033
        %v1042 = vadd.f32 %v1013, %v1034
        %v1043 = vld [vmem:[#allocation2 + $0x2] sm:$0xff]
        %v1044 = vld [vmem:[#allocation2 + $0x12] sm:$0xff]
        %v1045 = vld [vmem:[#allocation2 + $0x22] sm:$0xff]
        %v1046 = vld [vmem:[#allocation2 + $0x32] sm:$0xff]
        %v1047 = vld [vmem:[#allocation2 + $0x42] sm:$0xff]
        %v1048 = vld [vmem:[#allocation2 + $0x52] sm:$0xff]
        %v1049 = vld [vmem:[#allocation2 + $0x62] sm:$0xff]
        %v1050 = vld [vmem:[#allocation2 + $0x72] sm:$0xff]
        %v1051 = vld [vmem:[%s3 + $0x2] sm:$0x1]
        %v1052 = vlaneseq
        %v1053 = vshrl.u32 %v1052, 7
        %v1054 = vsub.s32 0, %v1053
        %v1055 = vrot.slane %v1051, %v1054
        %v1056 = vmul.f32 %v1043, %v1055
        %v1057 = vmul.f32 %v1044, %v1055
        %v1058 = vmul.f32 %v1045, %v1055
        %v1059 = vmul.f32 %v1046, %v1055
        %v1060 = vmul.f32 %v1047, %v1055
        %v1061 = vmul.f32 %v1048, %v1055
        %v1062 = vmul.f32 %v1049, %v1055
        %v1063 = vmul.f32 %v1050, %v1055
        %v1064 = vadd.f32 %v1035, %v1056
        %v1065 = vadd.f32 %v1036, %v1057
        %v1066 = vadd.f32 %v1037, %v1058
        %v1067 = vadd.f32 %v1038, %v1059
        %v1068 = vadd.f32 %v1039, %v1060
        %v1069 = vadd.f32 %v1040, %v1061
        %v1070 = vadd.f32 %v1041, %v1062
        %v1071 = vadd.f32 %v1042, %v1063
        %v1072 = vld [vmem:[%s960] sm:$0xff]
        %v1073 = vld [vmem:[%s960 + $0x10] sm:$0xff]
        %v1074 = vld [vmem:[%s960 + $0x20] sm:$0xff]
        %v1075 = vld [vmem:[%s960 + $0x30] sm:$0xff]
        %v1076 = vld [vmem:[%s960 + $0x40] sm:$0xff]
        %v1077 = vld [vmem:[%s960 + $0x50] sm:$0xff]
        %v1078 = vld [vmem:[%s960 + $0x60] sm:$0xff]
        %v1079 = vld [vmem:[%s960 + $0x70] sm:$0xff]
        %s1080 = scalar_lea.vmem %s3, 4
        %v1081 = vld [vmem:[%s1080] sm:$0x1]
        %v1082 = vlaneseq
        %v1083 = vshrl.u32 %v1082, 7
        %v1084 = vsub.s32 0, %v1083
        %v1085 = vrot.slane %v1081, %v1084
        %v1086 = vmul.f32 %v1072, %v1085
        %v1087 = vmul.f32 %v1073, %v1085
        %v1088 = vmul.f32 %v1074, %v1085
        %v1089 = vmul.f32 %v1075, %v1085
        %v1090 = vmul.f32 %v1076, %v1085
        %v1091 = vmul.f32 %v1077, %v1085
        %v1092 = vmul.f32 %v1078, %v1085
        %v1093 = vmul.f32 %v1079, %v1085
        %v1094 = vadd.f32 %v1064, %v1086
        %v1095 = vadd.f32 %v1065, %v1087
        %v1096 = vadd.f32 %v1066, %v1088
        %v1097 = vadd.f32 %v1067, %v1089
        %v1098 = vadd.f32 %v1068, %v1090
        %v1099 = vadd.f32 %v1069, %v1091
        %v1100 = vadd.f32 %v1070, %v1092
        %v1101 = vadd.f32 %v1071, %v1093
        %v1102 = vld [vmem:[%s960 + $0x1] sm:$0xff]
        %v1103 = vld [vmem:[%s960 + $0x11] sm:$0xff]
        %v1104 = vld [vmem:[%s960 + $0x21] sm:$0xff]
        %v1105 = vld [vmem:[%s960 + $0x31] sm:$0xff]
        %v1106 = vld [vmem:[%s960 + $0x41] sm:$0xff]
        %v1107 = vld [vmem:[%s960 + $0x51] sm:$0xff]
        %v1108 = vld [vmem:[%s960 + $0x61] sm:$0xff]
        %v1109 = vld [vmem:[%s960 + $0x71] sm:$0xff]
        %v1110 = vld [vmem:[%s1080 + $0x1] sm:$0x1]
        %v1111 = vlaneseq
        %v1112 = vshrl.u32 %v1111, 7
        %v1113 = vsub.s32 0, %v1112
        %v1114 = vrot.slane %v1110, %v1113
        %v1115 = vmul.f32 %v1102, %v1114
        %v1116 = vmul.f32 %v1103, %v1114
        %v1117 = vmul.f32 %v1104, %v1114
        %v1118 = vmul.f32 %v1105, %v1114
        %v1119 = vmul.f32 %v1106, %v1114
        %v1120 = vmul.f32 %v1107, %v1114
        %v1121 = vmul.f32 %v1108, %v1114
        %v1122 = vmul.f32 %v1109, %v1114
        %v1123 = vadd.f32 %v1094, %v1115
        %v1124 = vadd.f32 %v1095, %v1116
        %v1125 = vadd.f32 %v1096, %v1117
        %v1126 = vadd.f32 %v1097, %v1118
        %v1127 = vadd.f32 %v1098, %v1119
        %v1128 = vadd.f32 %v1099, %v1120
        %v1129 = vadd.f32 %v1100, %v1121
        %v1130 = vadd.f32 %v1101, %v1122
        %v1131 = vld [vmem:[%s960 + $0x2] sm:$0xff]
        %v1132 = vld [vmem:[%s960 + $0x12] sm:$0xff]
        %v1133 = vld [vmem:[%s960 + $0x22] sm:$0xff]
        %v1134 = vld [vmem:[%s960 + $0x32] sm:$0xff]
        %v1135 = vld [vmem:[%s960 + $0x42] sm:$0xff]
        %v1136 = vld [vmem:[%s960 + $0x52] sm:$0xff]
        %v1137 = vld [vmem:[%s960 + $0x62] sm:$0xff]
        %v1138 = vld [vmem:[%s960 + $0x72] sm:$0xff]
        %v1139 = vld [vmem:[%s1080 + $0x2] sm:$0x1]
        %v1140 = vlaneseq
        %v1141 = vshrl.u32 %v1140, 7
        %v1142 = vsub.s32 0, %v1141
        %v1143 = vrot.slane %v1139, %v1142
        %v1144 = vmul.f32 %v1131, %v1143
        %v1145 = vmul.f32 %v1132, %v1143
        %v1146 = vmul.f32 %v1133, %v1143
        %v1147 = vmul.f32 %v1134, %v1143
        %v1148 = vmul.f32 %v1135, %v1143
        %v1149 = vmul.f32 %v1136, %v1143
        %v1150 = vmul.f32 %v1137, %v1143
        %v1151 = vmul.f32 %v1138, %v1143
        %v1152 = vadd.f32 %v1123, %v1144
        %v1153 = vadd.f32 %v1124, %v1145
        %v1154 = vadd.f32 %v1125, %v1146
        %v1155 = vadd.f32 %v1126, %v1147
        %v1156 = vadd.f32 %v1127, %v1148
        %v1157 = vadd.f32 %v1128, %v1149
        %v1158 = vadd.f32 %v1129, %v1150
        %v1159 = vadd.f32 %v1130, %v1151
        %s1160 = scalar_lea.vmem [#allocation2], 32
        %v1161 = vld [vmem:[%s1160] sm:$0xff]
        %v1162 = vld [vmem:[%s1160 + $0x10] sm:$0xff]
        %v1163 = vld [vmem:[%s1160 + $0x20] sm:$0xff]
        %v1164 = vld [vmem:[%s1160 + $0x30] sm:$0xff]
        %v1165 = vld [vmem:[%s1160 + $0x40] sm:$0xff]
        %v1166 = vld [vmem:[%s1160 + $0x50] sm:$0xff]
        %v1167 = vld [vmem:[%s1160 + $0x60] sm:$0xff]
        %v1168 = vld [vmem:[%s1160 + $0x70] sm:$0xff]
        %s1169 = scalar_lea.vmem %s3, 8
        %v1170 = vld [vmem:[%s1169] sm:$0x1]
        %v1171 = vlaneseq
        %v1172 = vshrl.u32 %v1171, 7
        %v1173 = vsub.s32 0, %v1172
        %v1174 = vrot.slane %v1170, %v1173
        %v1175 = vmul.f32 %v1161, %v1174
        %v1176 = vmul.f32 %v1162, %v1174
        %v1177 = vmul.f32 %v1163, %v1174
        %v1178 = vmul.f32 %v1164, %v1174
        %v1179 = vmul.f32 %v1165, %v1174
        %v1180 = vmul.f32 %v1166, %v1174
        %v1181 = vmul.f32 %v1167, %v1174
        %v1182 = vmul.f32 %v1168, %v1174
        %v1183 = vadd.f32 %v1152, %v1175
        %v1184 = vadd.f32 %v1153, %v1176
        %v1185 = vadd.f32 %v1154, %v1177
        %v1186 = vadd.f32 %v1155, %v1178
        %v1187 = vadd.f32 %v1156, %v1179
        %v1188 = vadd.f32 %v1157, %v1180
        %v1189 = vadd.f32 %v1158, %v1181
        %v1190 = vadd.f32 %v1159, %v1182
        %v1191 = vld [vmem:[%s1160 + $0x1] sm:$0xff]
        %v1192 = vld [vmem:[%s1160 + $0x11] sm:$0xff]
        %v1193 = vld [vmem:[%s1160 + $0x21] sm:$0xff]
        %v1194 = vld [vmem:[%s1160 + $0x31] sm:$0xff]
        %v1195 = vld [vmem:[%s1160 + $0x41] sm:$0xff]
        %v1196 = vld [vmem:[%s1160 + $0x51] sm:$0xff]
        %v1197 = vld [vmem:[%s1160 + $0x61] sm:$0xff]
        %v1198 = vld [vmem:[%s1160 + $0x71] sm:$0xff]
        %v1199 = vld [vmem:[%s1169 + $0x1] sm:$0x1]
        %v1200 = vlaneseq
        %v1201 = vshrl.u32 %v1200, 7
        %v1202 = vsub.s32 0, %v1201
        %v1203 = vrot.slane %v1199, %v1202
        %v1204 = vmul.f32 %v1191, %v1203
        %v1205 = vmul.f32 %v1192, %v1203
        %v1206 = vmul.f32 %v1193, %v1203
        %v1207 = vmul.f32 %v1194, %v1203
        %v1208 = vmul.f32 %v1195, %v1203
        %v1209 = vmul.f32 %v1196, %v1203
        %v1210 = vmul.f32 %v1197, %v1203
        %v1211 = vmul.f32 %v1198, %v1203
        %v1212 = vadd.f32 %v1183, %v1204
        %v1213 = vadd.f32 %v1184, %v1205
        %v1214 = vadd.f32 %v1185, %v1206
        %v1215 = vadd.f32 %v1186, %v1207
        %v1216 = vadd.f32 %v1187, %v1208
        %v1217 = vadd.f32 %v1188, %v1209
        %v1218 = vadd.f32 %v1189, %v1210
        %v1219 = vadd.f32 %v1190, %v1211
        %v1220 = vld [vmem:[%s1160 + $0x2] sm:$0xff]
        %v1221 = vld [vmem:[%s1160 + $0x12] sm:$0xff]
        %v1222 = vld [vmem:[%s1160 + $0x22] sm:$0xff]
        %v1223 = vld [vmem:[%s1160 + $0x32] sm:$0xff]
        %v1224 = vld [vmem:[%s1160 + $0x42] sm:$0xff]
        %v1225 = vld [vmem:[%s1160 + $0x52] sm:$0xff]
        %v1226 = vld [vmem:[%s1160 + $0x62] sm:$0xff]
        %v1227 = vld [vmem:[%s1160 + $0x72] sm:$0xff]
        %v1228 = vld [vmem:[%s1169 + $0x2] sm:$0x1]
        %v1229 = vlaneseq
        %v1230 = vshrl.u32 %v1229, 7
        %v1231 = vsub.s32 0, %v1230
        %v1232 = vrot.slane %v1228, %v1231
        %v1233 = vmul.f32 %v1220, %v1232
        %v1234 = vmul.f32 %v1221, %v1232
        %v1235 = vmul.f32 %v1222, %v1232
        %v1236 = vmul.f32 %v1223, %v1232
        %v1237 = vmul.f32 %v1224, %v1232
        %v1238 = vmul.f32 %v1225, %v1232
        %v1239 = vmul.f32 %v1226, %v1232
        %v1240 = vmul.f32 %v1227, %v1232
        %v1241 = vadd.f32 %v1212, %v1233
        %v1242 = vadd.f32 %v1213, %v1234
        %v1243 = vadd.f32 %v1214, %v1235
        %v1244 = vadd.f32 %v1215, %v1236
        %v1245 = vadd.f32 %v1216, %v1237
        %v1246 = vadd.f32 %v1217, %v1238
        %v1247 = vadd.f32 %v1218, %v1239
        %v1248 = vadd.f32 %v1219, %v1240
        %v1249 = vxor.u32 %v1241, 2147483648
        %v1250 = vxor.u32 %v1242, 2147483648
        %v1251 = vxor.u32 %v1243, 2147483648
        %v1252 = vxor.u32 %v1244, 2147483648
        %v1253 = vxor.u32 %v1245, 2147483648
        %v1254 = vxor.u32 %v1246, 2147483648
        %v1255 = vxor.u32 %v1247, 2147483648
        %v1256 = vxor.u32 %v1248, 2147483648
        %v1257 = vmul.f32 %v1249, 1.442695
        %v1258 = vpow.pop %v1257
        %v1259 = vmul.f32 %v1250, 1.442695
        %v1260 = vpow.pop %v1259
        %v1261 = vmul.f32 %v1251, 1.442695
        %v1262 = vpow.pop %v1261
        %v1263 = vmul.f32 %v1252, 1.442695
        %v1264 = vpow.pop %v1263
        %v1265 = vmul.f32 %v1253, 1.442695
        %v1266 = vpow.pop %v1265
        %v1267 = vmul.f32 %v1254, 1.442695
        %v1268 = vpow.pop %v1267
        %v1269 = vmul.f32 %v1255, 1.442695
        %v1270 = vpow.pop %v1269
        %v1271 = vmul.f32 %v1256, 1.442695
        %v1272 = vpow.pop %v1271
        %v1273 = vadd.f32 %v1258, 1.0
        %v1274 = vadd.f32 %v1260, 1.0
        %v1275 = vadd.f32 %v1262, 1.0
        %v1276 = vadd.f32 %v1264, 1.0
        %v1277 = vadd.f32 %v1266, 1.0
        %v1278 = vadd.f32 %v1268, 1.0
        %v1279 = vadd.f32 %v1270, 1.0
        %v1280 = vadd.f32 %v1272, 1.0
        %v1281 = vrcp.pop %v1273
        %v1282 = vmul.f32 1.0, %v1281
        %v1283 = vrcp.pop %v1274
        %v1284 = vmul.f32 1.0, %v1283
        %v1285 = vrcp.pop %v1275
        %v1286 = vmul.f32 1.0, %v1285
        %v1287 = vrcp.pop %v1276
        %v1288 = vmul.f32 1.0, %v1287
        %v1289 = vrcp.pop %v1277
        %v1290 = vmul.f32 1.0, %v1289
        %v1291 = vrcp.pop %v1278
        %v1292 = vmul.f32 1.0, %v1291
        %v1293 = vrcp.pop %v1279
        %v1294 = vmul.f32 1.0, %v1293
        %v1295 = vrcp.pop %v1280
        %v1296 = vmul.f32 1.0, %v1295
        %v1297 = vmul.f32 %v1241, %v1282
        %v1298 = vmul.f32 %v1242, %v1284
        %v1299 = vmul.f32 %v1243, %v1286
        %v1300 = vmul.f32 %v1244, %v1288
        %v1301 = vmul.f32 %v1245, %v1290
        %v1302 = vmul.f32 %v1246, %v1292
        %v1303 = vmul.f32 %v1247, %v1294
        %v1304 = vmul.f32 %v1248, %v1296
        %v1305 = vadd.f32 %v1297, %v1298
        %v1306 = vadd.f32 %v1305, %v1299
        %v1307 = vadd.f32 %v1306, %v1300
        %v1308 = vadd.f32 %v1307, %v1301
        %v1309 = vadd.f32 %v1308, %v1302
        %v1310 = vadd.f32 %v1309, %v1303
        %v1311 = vadd.f32 %v1310, %v1304
        %v1312 = vrot.slane %v1311, 4
        %v1313 = vadd.f32 %v1311, %v1312
        %v1314 = vrot.slane %v1313, 2
        %v1315 = vadd.f32 %v1313, %v1314
        %v1316 = vrot.slane %v1315, 1
        %v1317 = vadd.f32 %v1315, %v1316
        %v1318 = vrcp.pop 64.0
        %v1319 = vmul.f32 %v1317, %v1318
        %v1320 = vpack.c.bf16 %v1319, %v1319
        %v1321 = vld [vmem:[%s4] sm:$0xf]
        %v1322 = vld [vmem:[%s4 + $0x4] sm:$0xf]
        %v1323 = vld [vmem:[%s4 + $0x8] sm:$0xf]
        %v1324 = vld [vmem:[%s4 + $0xc] sm:$0xf]
        %v1325 = vld [vmem:[%s4 + $0x10] sm:$0xf]
        %v1326 = vld [vmem:[%s4 + $0x14] sm:$0xf]
        %v1327 = vld [vmem:[%s4 + $0x18] sm:$0xf]
        %v1328 = vld [vmem:[%s4 + $0x1c] sm:$0xf]
        %v1329 = vld [vmem:[%s4 + $0x20] sm:$0xf]
        %v1330 = vld [vmem:[%s4 + $0x24] sm:$0xf]
        %v1331 = vld [vmem:[%s4 + $0x28] sm:$0xf]
        %v1332 = vld [vmem:[%s4 + $0x2c] sm:$0xf]
        %v1333 = vld [vmem:[%s4 + $0x30] sm:$0xf]
        %v1334 = vld [vmem:[%s4 + $0x34] sm:$0xf]
        %v1335 = vld [vmem:[%s4 + $0x38] sm:$0xf]
        %v1336 = vld [vmem:[%s4 + $0x3c] sm:$0xf]
        %v1337 = vld [vmem:[%s5] sm:$0x1]
        %v1354 = vunpack.c.l.b16 %v1321
        %v1355 = vunpack.c.l.b16 %v1322
        %v1356 = vunpack.c.l.b16 %v1323
        %v1357 = vunpack.c.l.b16 %v1324
        %v1358 = vunpack.c.l.b16 %v1325
        %v1359 = vunpack.c.l.b16 %v1326
        %v1360 = vunpack.c.l.b16 %v1327
        %v1361 = vunpack.c.l.b16 %v1328
        %v1362 = vunpack.c.l.b16 %v1329
        %v1363 = vunpack.c.l.b16 %v1330
        %v1364 = vunpack.c.l.b16 %v1331
        %v1365 = vunpack.c.l.b16 %v1332
        %v1366 = vunpack.c.l.b16 %v1333
        %v1367 = vunpack.c.l.b16 %v1334
        %v1368 = vunpack.c.l.b16 %v1335
        %v1369 = vunpack.c.l.b16 %v1336
        %v1370 = vpack.c.b16 %v1355, %v1354
        %v1371 = vpack.c.b16 %v1357, %v1356
        %v1372 = vpack.c.b16 %v1359, %v1358
        %v1373 = vpack.c.b16 %v1361, %v1360
        %v1374 = vpack.c.b16 %v1363, %v1362
        %v1375 = vpack.c.b16 %v1365, %v1364
        %v1376 = vpack.c.b16 %v1367, %v1366
        %v1377 = vpack.c.b16 %v1369, %v1368
        %1386 = vmatprep.subr.bf16.mxu0 0
        %1387 = vmatpush1.bf16.msra.mxu0 %v1370
        %1388 = vmatprep.subr.bf16.mxu0 0
        %1389 = vmatpush1.bf16.msra.mxu0 %v1371
        %1390 = vmatprep.subr.bf16.mxu0 0
        %1391 = vmatpush1.bf16.msra.mxu0 %v1372
        %1392 = vmatprep.subr.bf16.mxu0 0
        %1393 = vmatpush1.bf16.msra.mxu0 %v1373
        %1394 = vmatprep.subr.bf16.mxu0 0
        %1395 = vmatpush1.bf16.msra.mxu0 %v1374
        %1396 = vmatprep.subr.bf16.mxu0 0
        %1397 = vmatpush1.bf16.msra.mxu0 %v1375
        %1398 = vmatprep.subr.bf16.mxu0 0
        %1399 = vmatpush1.bf16.msra.mxu0 %v1376
        %1400 = vmatprep.subr.bf16.mxu0 0
        %1401 = vmatpush1.bf16.msra.mxu0 %v1377
        %1402 = vmatprep.subr.bf16.mxu0 0
        %1403 = vmatpush1.bf16.msra.mxu0 0
        %1404 = vmatprep.subr.bf16.mxu0 0
        %1405 = vmatpush1.bf16.msra.mxu0 0
        %1406 = vmatprep.subr.bf16.mxu0 0
        %1407 = vmatpush1.bf16.msra.mxu0 0
        %1408 = vmatprep.subr.bf16.mxu0 0
        %1409 = vmatpush1.bf16.msra.mxu0 0
        %1410 = vmatprep.subr.bf16.mxu0 0
        %1411 = vmatpush1.bf16.msra.mxu0 0
        %1412 = vmatprep.subr.bf16.mxu0 0
        %1413 = vmatpush1.bf16.msra.mxu0 0
        %1414 = vmatprep.subr.bf16.mxu0 0
        %1415 = vmatpush1.bf16.msra.mxu0 0
        %1416 = vmatprep.subr.bf16.mxu0 0
        %1417 = vmatpush1.bf16.msra.mxu0 0
        %1418 = vmatprep.mubr.bf16.mxu0 0
        %1419 = vmatmul.mubr.bf16.gmra.mrb[0].mxu0 %v1320
        %v1420 = vpop.f32.mrb[0].mxu0
        %v1421 = vadd.f32 %v1337, %v1420
        %v1422 = vpop.f32.mrb[0].mxu0
        %v1423 = vpop.f32.mrb[0].mxu0
        %v1424 = vpop.f32.mrb[0].mxu0
        %1425 = vdwg.mxu0
        %v1426 = vxor.u32 %v1421, 2147483648
        %v1427 = vmul.f32 %v1426, 1.442695
        %v1428 = vpow.pop %v1427
        %v1429 = vadd.f32 %v1428, 1.0
        %v1430 = vrcp.pop %v1429
        %v1431 = vmul.f32 1.0, %v1430
        %v1432 = vmul.f32 %v1421, %v1431
        %v1433 = vpack.c.bf16 %v1432, %v1432
        %v1434 = vld [vmem:[%s6] sm:$0xf]
        %v1435 = vld [vmem:[%s6 + $0x4] sm:$0xf]
        %v1436 = vld [vmem:[%s6 + $0x8] sm:$0xf]
        %v1437 = vld [vmem:[%s6 + $0xc] sm:$0xf]
        %v1438 = vld [vmem:[%s7] sm:$0x1]
        %v1443 = vunpack.c.l.b16 %v1434
        %v1444 = vunpack.c.l.b16 %v1435
        %v1445 = vunpack.c.l.b16 %v1436
        %v1446 = vunpack.c.l.b16 %v1437
        %v1447 = vpack.c.b16 %v1444, %v1443
        %v1448 = vpack.c.b16 %v1446, %v1445
        %vm1451 = vcmask 261120
        %v1453 = vsel %vm1451, %v1433, 0
        %1455 = vmatprep.subr.bf16.mxu0 0
        %1456 = vmatpush1.bf16.msra.mxu0 %v1447
        %1457 = vmatprep.subr.bf16.mxu0 0
        %1458 = vmatpush1.bf16.msra.mxu0 %v1448
        %1459 = vmatprep.subr.bf16.mxu0 0
        %1460 = vmatpush1.bf16.msra.mxu0 0
        %1461 = vmatprep.subr.bf16.mxu0 0
        %1462 = vmatpush1.bf16.msra.mxu0 0
        %1463 = vmatprep.subr.bf16.mxu0 0
        %1464 = vmatpush1.bf16.msra.mxu0 0
        %1465 = vmatprep.subr.bf16.mxu0 0
        %1466 = vmatpush1.bf16.msra.mxu0 0
        %1467 = vmatprep.subr.bf16.mxu0 0
        %1468 = vmatpush1.bf16.msra.mxu0 0
        %1469 = vmatprep.subr.bf16.mxu0 0
        %1470 = vmatpush1.bf16.msra.mxu0 0
        %1471 = vmatprep.subr.bf16.mxu0 0
        %1472 = vmatpush1.bf16.msra.mxu0 0
        %1473 = vmatprep.subr.bf16.mxu0 0
        %1474 = vmatpush1.bf16.msra.mxu0 0
        %1475 = vmatprep.subr.bf16.mxu0 0
        %1476 = vmatpush1.bf16.msra.mxu0 0
        %1477 = vmatprep.subr.bf16.mxu0 0
        %1478 = vmatpush1.bf16.msra.mxu0 0
        %1479 = vmatprep.subr.bf16.mxu0 0
        %1480 = vmatpush1.bf16.msra.mxu0 0
        %1481 = vmatprep.subr.bf16.mxu0 0
        %1482 = vmatpush1.bf16.msra.mxu0 0
        %1483 = vmatprep.subr.bf16.mxu0 0
        %1484 = vmatpush1.bf16.msra.mxu0 0
        %1485 = vmatprep.subr.bf16.mxu0 0
        %1486 = vmatpush1.bf16.msra.mxu0 0
        %1487 = vmatprep.mubr.bf16.mxu0 0
        %1488 = vmatmul.mubr.bf16.gmra.mrb[0].mxu0 %v1453
        %v1489 = vpop.f32.mrb[0].mxu0
        %v1490 = vadd.f32 %v1438, %v1489
        %v1491 = vpop.f32.mrb[0].mxu0
        %v1492 = vpop.f32.mrb[0].mxu0
        %v1493 = vpop.f32.mrb[0].mxu0
        %1494 = vdwg.mxu0
        %v1495 = vxor.u32 %v1490, 2147483648
        %v1496 = vmul.f32 %v1495, 1.442695
        %v1497 = vpow.pop %v1496
        %v1498 = vadd.f32 %v1497, 1.0
        %v1499 = vrcp.pop %v1498
        %v1500 = vmul.f32 1.0, %v1499
        %v1501 = vlaneseq
        %v1502 = vshrl.u32 %v1501, 7
        %v1503 = vsub.s32 0, %v1502
        %v1504 = vrot.slane %v1500, %v1503
        %v1505 = vmul.f32 %v1297, %v1504
        %v1506 = vmul.f32 %v1298, %v1504
        %v1507 = vmul.f32 %v1299, %v1504
        %v1508 = vmul.f32 %v1300, %v1504
        %v1509 = vmul.f32 %v1301, %v1504
        %v1510 = vmul.f32 %v1302, %v1504
        %v1511 = vmul.f32 %v1303, %v1504
        %v1512 = vmul.f32 %v1304, %v1504
        %v1513 = vpack.c.bf16 %v1506, %v1505
        %v1514 = vpack.c.bf16 %v1508, %v1507
        %v1515 = vpack.c.bf16 %v1510, %v1509
        %v1516 = vpack.c.bf16 %v1512, %v1511
        %v1517 = vld [vmem:[%s8] sm:$0xf]
        %v1518 = vld [vmem:[%s8 + $0x4] sm:$0xf]
        %v1519 = vld [vmem:[%s8 + $0x8] sm:$0xf]
        %v1520 = vld [vmem:[%s8 + $0xc] sm:$0xf]
        %v1521 = vld [vmem:[%s8 + $0x10] sm:$0xf]
        %v1522 = vld [vmem:[%s8 + $0x14] sm:$0xf]
        %v1523 = vld [vmem:[%s8 + $0x18] sm:$0xf]
        %v1524 = vld [vmem:[%s8 + $0x1c] sm:$0xf]
        %v1525 = vld [vmem:[%s8 + $0x20] sm:$0xf]
        %v1526 = vld [vmem:[%s8 + $0x24] sm:$0xf]
        %v1527 = vld [vmem:[%s8 + $0x28] sm:$0xf]
        %v1528 = vld [vmem:[%s8 + $0x2c] sm:$0xf]
        %v1529 = vld [vmem:[%s8 + $0x30] sm:$0xf]
        %v1530 = vld [vmem:[%s8 + $0x34] sm:$0xf]
        %v1531 = vld [vmem:[%s8 + $0x38] sm:$0xf]
        %v1532 = vld [vmem:[%s8 + $0x3c] sm:$0xf]
        %v1533 = vld [vmem:[%s9] sm:$0x1]
        %v1535 = vlaneseq
        %v1536 = vshrl.u32 %v1535, 7
        %v1537 = vsub.s32 0, %v1536
        %v1538 = vrot.slane %v1533, %v1537
        %v1556 = vunpack.c.l.b16 %v1517
        %v1557 = vunpack.c.l.b16 %v1518
        %v1558 = vunpack.c.l.b16 %v1519
        %v1559 = vunpack.c.l.b16 %v1520
        %v1560 = vunpack.c.l.b16 %v1521
        %v1561 = vunpack.c.l.b16 %v1522
        %v1562 = vunpack.c.l.b16 %v1523
        %v1563 = vunpack.c.l.b16 %v1524
        %v1564 = vunpack.c.l.b16 %v1525
        %v1565 = vunpack.c.l.b16 %v1526
        %v1566 = vunpack.c.l.b16 %v1527
        %v1567 = vunpack.c.l.b16 %v1528
        %v1568 = vunpack.c.l.b16 %v1529
        %v1569 = vunpack.c.l.b16 %v1530
        %v1570 = vunpack.c.l.b16 %v1531
        %v1571 = vunpack.c.l.b16 %v1532
        %v1572 = vpack.c.b16 %v1557, %v1556
        %v1573 = vpack.c.b16 %v1559, %v1558
        %v1574 = vpack.c.b16 %v1561, %v1560
        %v1575 = vpack.c.b16 %v1563, %v1562
        %v1576 = vpack.c.b16 %v1565, %v1564
        %v1577 = vpack.c.b16 %v1567, %v1566
        %v1578 = vpack.c.b16 %v1569, %v1568
        %v1579 = vpack.c.b16 %v1571, %v1570
        %1588 = vmatprep.subr.bf16.mxu0 0
        %1589 = vmatpush1.bf16.msra.mxu0 %v1572
        %1590 = vmatprep.subr.bf16.mxu0 0
        %1591 = vmatpush1.bf16.msra.mxu0 %v1573
        %1592 = vmatprep.subr.bf16.mxu0 0
        %1593 = vmatpush1.bf16.msra.mxu0 %v1574
        %1594 = vmatprep.subr.bf16.mxu0 0
        %1595 = vmatpush1.bf16.msra.mxu0 %v1575
        %1596 = vmatprep.subr.bf16.mxu0 0
        %1597 = vmatpush1.bf16.msra.mxu0 %v1576
        %1598 = vmatprep.subr.bf16.mxu0 0
        %1599 = vmatpush1.bf16.msra.mxu0 %v1577
        %1600 = vmatprep.subr.bf16.mxu0 0
        %1601 = vmatpush1.bf16.msra.mxu0 %v1578
        %1602 = vmatprep.subr.bf16.mxu0 0
        %1603 = vmatpush1.bf16.msra.mxu0 %v1579
        %1604 = vmatprep.subr.bf16.mxu0 0
        %1605 = vmatpush1.bf16.msra.mxu0 0
        %1606 = vmatprep.subr.bf16.mxu0 0
        %1607 = vmatpush1.bf16.msra.mxu0 0
        %1608 = vmatprep.subr.bf16.mxu0 0
        %1609 = vmatpush1.bf16.msra.mxu0 0
        %1610 = vmatprep.subr.bf16.mxu0 0
        %1611 = vmatpush1.bf16.msra.mxu0 0
        %1612 = vmatprep.subr.bf16.mxu0 0
        %1613 = vmatpush1.bf16.msra.mxu0 0
        %1614 = vmatprep.subr.bf16.mxu0 0
        %1615 = vmatpush1.bf16.msra.mxu0 0
        %1616 = vmatprep.subr.bf16.mxu0 0
        %1617 = vmatpush1.bf16.msra.mxu0 0
        %1618 = vmatprep.subr.bf16.mxu0 0
        %1619 = vmatpush1.bf16.msra.mxu0 0
        %1620 = vmatprep.mubr.bf16.mxu0 0
        %1621 = vmatmul.mubr.bf16.gmra.mrb[0].mxu0 %v1513
        %v1622 = vpop.f32.mrb[0].mxu0
        %v1623 = vadd.f32 %v1538, %v1622
        %v1624 = vpop.f32.mrb[0].mxu0
        %v1625 = vpop.f32.mrb[0].mxu0
        %v1626 = vadd.f32 %v1538, %v1625
        %v1627 = vpop.f32.mrb[0].mxu0
        %1628 = vmatprep.mubr.bf16.mxu0 0
        %1629 = vmatmul.mubr.bf16.gmra.mrb[0].mxu0 %v1514
        %v1630 = vpop.f32.mrb[0].mxu0
        %v1631 = vadd.f32 %v1538, %v1630
        %v1632 = vpop.f32.mrb[0].mxu0
        %v1633 = vpop.f32.mrb[0].mxu0
        %v1634 = vadd.f32 %v1538, %v1633
        %v1635 = vpop.f32.mrb[0].mxu0
        %1636 = vmatprep.mubr.bf16.mxu0 0
        %1637 = vmatmul.mubr.bf16.gmra.mrb[0].mxu0 %v1515
        %v1638 = vpop.f32.mrb[0].mxu0
        %v1639 = vadd.f32 %v1538, %v1638
        %v1640 = vpop.f32.mrb[0].mxu0
        %v1641 = vpop.f32.mrb[0].mxu0
        %v1642 = vadd.f32 %v1538, %v1641
        %v1643 = vpop.f32.mrb[0].mxu0
        %1644 = vmatprep.mubr.bf16.mxu0 0
        %1645 = vmatmul.mubr.bf16.gmra.mrb[0].mxu0 %v1516
        %v1646 = vpop.f32.mrb[0].mxu0
        %v1647 = vadd.f32 %v1538, %v1646
        %v1648 = vpop.f32.mrb[0].mxu0
        %v1649 = vpop.f32.mrb[0].mxu0
        %v1650 = vadd.f32 %v1538, %v1649
        %v1651 = vpop.f32.mrb[0].mxu0
        %1652 = vdwg.mxu0
        %v1653 = vpack.c.bf16 %v1626, %v1623
        %v1654 = vpack.c.bf16 %v1634, %v1631
        %v1655 = vpack.c.bf16 %v1642, %v1639
        %v1656 = vpack.c.bf16 %v1650, %v1647
        %v1657 = vld [vmem:[%s10] sm:$0xf]
        %v1658 = vld [vmem:[%s10 + $0x4] sm:$0xf]
        %v1659 = vld [vmem:[%s10 + $0x8] sm:$0xf]
        %v1660 = vld [vmem:[%s10 + $0xc] sm:$0xf]
        %v1661 = vld [vmem:[%s10 + $0x10] sm:$0xf]
        %v1662 = vld [vmem:[%s10 + $0x14] sm:$0xf]
        %v1663 = vld [vmem:[%s10 + $0x18] sm:$0xf]
        %v1664 = vld [vmem:[%s10 + $0x1c] sm:$0xf]
        %v1665 = vld [vmem:[%s10 + $0x20] sm:$0xf]
        %v1666 = vld [vmem:[%s10 + $0x24] sm:$0xf]
        %v1667 = vld [vmem:[%s10 + $0x28] sm:$0xf]
        %v1668 = vld [vmem:[%s10 + $0x2c] sm:$0xf]
        %v1669 = vld [vmem:[%s10 + $0x30] sm:$0xf]
        %v1670 = vld [vmem:[%s10 + $0x34] sm:$0xf]
        %v1671 = vld [vmem:[%s10 + $0x38] sm:$0xf]
        %v1672 = vld [vmem:[%s10 + $0x3c] sm:$0xf]
        %v1673 = vld [vmem:[%s11] sm:$0x1]
        %v1675 = vlaneseq
        %v1676 = vshrl.u32 %v1675, 7
        %v1677 = vsub.s32 0, %v1676
        %v1678 = vrot.slane %v1673, %v1677
        %v1696 = vunpack.c.l.b16 %v1657
        %v1697 = vunpack.c.l.b16 %v1658
        %v1698 = vunpack.c.l.b16 %v1659
        %v1699 = vunpack.c.l.b16 %v1660
        %v1700 = vunpack.c.l.b16 %v1661
        %v1701 = vunpack.c.l.b16 %v1662
        %v1702 = vunpack.c.l.b16 %v1663
        %v1703 = vunpack.c.l.b16 %v1664
        %v1704 = vunpack.c.l.b16 %v1665
        %v1705 = vunpack.c.l.b16 %v1666
        %v1706 = vunpack.c.l.b16 %v1667
        %v1707 = vunpack.c.l.b16 %v1668
        %v1708 = vunpack.c.l.b16 %v1669
        %v1709 = vunpack.c.l.b16 %v1670
        %v1710 = vunpack.c.l.b16 %v1671
        %v1711 = vunpack.c.l.b16 %v1672
        %v1712 = vpack.c.b16 %v1697, %v1696
        %v1713 = vpack.c.b16 %v1699, %v1698
        %v1714 = vpack.c.b16 %v1701, %v1700
        %v1715 = vpack.c.b16 %v1703, %v1702
        %v1716 = vpack.c.b16 %v1705, %v1704
        %v1717 = vpack.c.b16 %v1707, %v1706
        %v1718 = vpack.c.b16 %v1709, %v1708
        %v1719 = vpack.c.b16 %v1711, %v1710
        %1728 = vmatprep.subr.bf16.mxu0 0
        %1729 = vmatpush1.bf16.msra.mxu0 %v1712
        %1730 = vmatprep.subr.bf16.mxu0 0
        %1731 = vmatpush1.bf16.msra.mxu0 %v1713
        %1732 = vmatprep.subr.bf16.mxu0 0
        %1733 = vmatpush1.bf16.msra.mxu0 %v1714
        %1734 = vmatprep.subr.bf16.mxu0 0
        %1735 = vmatpush1.bf16.msra.mxu0 %v1715
        %1736 = vmatprep.subr.bf16.mxu0 0
        %1737 = vmatpush1.bf16.msra.mxu0 %v1716
        %1738 = vmatprep.subr.bf16.mxu0 0
        %1739 = vmatpush1.bf16.msra.mxu0 %v1717
        %1740 = vmatprep.subr.bf16.mxu0 0
        %1741 = vmatpush1.bf16.msra.mxu0 %v1718
        %1742 = vmatprep.subr.bf16.mxu0 0
        %1743 = vmatpush1.bf16.msra.mxu0 %v1719
        %1744 = vmatprep.subr.bf16.mxu0 0
        %1745 = vmatpush1.bf16.msra.mxu0 0
        %1746 = vmatprep.subr.bf16.mxu0 0
        %1747 = vmatpush1.bf16.msra.mxu0 0
        %1748 = vmatprep.subr.bf16.mxu0 0
        %1749 = vmatpush1.bf16.msra.mxu0 0
        %1750 = vmatprep.subr.bf16.mxu0 0
        %1751 = vmatpush1.bf16.msra.mxu0 0
        %1752 = vmatprep.subr.bf16.mxu0 0
        %1753 = vmatpush1.bf16.msra.mxu0 0
        %1754 = vmatprep.subr.bf16.mxu0 0
        %1755 = vmatpush1.bf16.msra.mxu0 0
        %1756 = vmatprep.subr.bf16.mxu0 0
        %1757 = vmatpush1.bf16.msra.mxu0 0
        %1758 = vmatprep.subr.bf16.mxu0 0
        %1759 = vmatpush1.bf16.msra.mxu0 0
        %1760 = vmatprep.mubr.bf16.mxu0 0
        %1761 = vmatmul.mubr.bf16.gmra.mrb[0].mxu0 %v1653
        %v1762 = vpop.f32.mrb[0].mxu0
        %v1763 = vadd.f32 %v1678, %v1762
        %v1764 = vpop.f32.mrb[0].mxu0
        %v1765 = vpop.f32.mrb[0].mxu0
        %v1766 = vadd.f32 %v1678, %v1765
        %v1767 = vpop.f32.mrb[0].mxu0
        %1768 = vmatprep.mubr.bf16.mxu0 0
        %1769 = vmatmul.mubr.bf16.gmra.mrb[0].mxu0 %v1654
        %v1770 = vpop.f32.mrb[0].mxu0
        %v1771 = vadd.f32 %v1678, %v1770
        %v1772 = vpop.f32.mrb[0].mxu0
        %v1773 = vpop.f32.mrb[0].mxu0
        %v1774 = vadd.f32 %v1678, %v1773
        %v1775 = vpop.f32.mrb[0].mxu0
        %1776 = vmatprep.mubr.bf16.mxu0 0
        %1777 = vmatmul.mubr.bf16.gmra.mrb[0].mxu0 %v1655
        %v1778 = vpop.f32.mrb[0].mxu0
        %v1779 = vadd.f32 %v1678, %v1778
        %v1780 = vpop.f32.mrb[0].mxu0
        %v1781 = vpop.f32.mrb[0].mxu0
        %v1782 = vadd.f32 %v1678, %v1781
        %v1783 = vpop.f32.mrb[0].mxu0
        %1784 = vmatprep.mubr.bf16.mxu0 0
        %1785 = vmatmul.mubr.bf16.gmra.mrb[0].mxu0 %v1656
        %v1786 = vpop.f32.mrb[0].mxu0
        %v1787 = vadd.f32 %v1678, %v1786
        %v1788 = vpop.f32.mrb[0].mxu0
        %v1789 = vpop.f32.mrb[0].mxu0
        %v1790 = vadd.f32 %v1678, %v1789
        %v1791 = vpop.f32.mrb[0].mxu0
        %1792 = vdwg.mxu0
        %v1793 = vxor.u32 %v1763, 2147483648
        %v1794 = vxor.u32 %v1766, 2147483648
        %v1795 = vxor.u32 %v1771, 2147483648
        %v1796 = vxor.u32 %v1774, 2147483648
        %v1797 = vxor.u32 %v1779, 2147483648
        %v1798 = vxor.u32 %v1782, 2147483648
        %v1799 = vxor.u32 %v1787, 2147483648
        %v1800 = vxor.u32 %v1790, 2147483648
        %v1801 = vmul.f32 %v1793, 1.442695
        %v1802 = vpow.pop %v1801
        %v1803 = vmul.f32 %v1794, 1.442695
        %v1804 = vpow.pop %v1803
        %v1805 = vmul.f32 %v1795, 1.442695
        %v1806 = vpow.pop %v1805
        %v1807 = vmul.f32 %v1796, 1.442695
        %v1808 = vpow.pop %v1807
        %v1809 = vmul.f32 %v1797, 1.442695
        %v1810 = vpow.pop %v1809
        %v1811 = vmul.f32 %v1798, 1.442695
        %v1812 = vpow.pop %v1811
        %v1813 = vmul.f32 %v1799, 1.442695
        %v1814 = vpow.pop %v1813
        %v1815 = vmul.f32 %v1800, 1.442695
        %v1816 = vpow.pop %v1815
        %v1817 = vadd.f32 %v1802, 1.0
        %v1818 = vadd.f32 %v1804, 1.0
        %v1819 = vadd.f32 %v1806, 1.0
        %v1820 = vadd.f32 %v1808, 1.0
        %v1821 = vadd.f32 %v1810, 1.0
        %v1822 = vadd.f32 %v1812, 1.0
        %v1823 = vadd.f32 %v1814, 1.0
        %v1824 = vadd.f32 %v1816, 1.0
        %v1825 = vrcp.pop %v1817
        %v1826 = vmul.f32 1.0, %v1825
        %v1827 = vrcp.pop %v1818
        %v1828 = vmul.f32 1.0, %v1827
        %v1829 = vrcp.pop %v1819
        %v1830 = vmul.f32 1.0, %v1829
        %v1831 = vrcp.pop %v1820
        %v1832 = vmul.f32 1.0, %v1831
        %v1833 = vrcp.pop %v1821
        %v1834 = vmul.f32 1.0, %v1833
        %v1835 = vrcp.pop %v1822
        %v1836 = vmul.f32 1.0, %v1835
        %v1837 = vrcp.pop %v1823
        %v1838 = vmul.f32 1.0, %v1837
        %v1839 = vrcp.pop %v1824
        %v1840 = vmul.f32 1.0, %v1839
        %v1841 = vmul.f32 %v1763, %v1826
        %v1842 = vmul.f32 %v1766, %v1828
        %v1843 = vmul.f32 %v1771, %v1830
        %v1844 = vmul.f32 %v1774, %v1832
        %v1845 = vmul.f32 %v1779, %v1834
        %v1846 = vmul.f32 %v1782, %v1836
        %v1847 = vmul.f32 %v1787, %v1838
        %v1848 = vmul.f32 %v1790, %v1840
        %v1849 = vadd.f32 %v1841, %v1842
        %v1850 = vadd.f32 %v1849, %v1843
        %v1851 = vadd.f32 %v1850, %v1844
        %v1852 = vadd.f32 %v1851, %v1845
        %v1853 = vadd.f32 %v1852, %v1846
        %v1854 = vadd.f32 %v1853, %v1847
        %v1855 = vadd.f32 %v1854, %v1848
        %v1856 = vrot.slane %v1855, 4
        %v1857 = vadd.f32 %v1855, %v1856
        %v1858 = vrot.slane %v1857, 2
        %v1859 = vadd.f32 %v1857, %v1858
        %v1860 = vrot.slane %v1859, 1
        %v1861 = vadd.f32 %v1859, %v1860
        %v1862 = vmul.f32 %v1861, %v1318
        %v1863 = vpack.c.bf16 %v1862, %v1862
        %v1864 = vld [vmem:[%s12] sm:$0xf]
        %v1865 = vld [vmem:[%s12 + $0x4] sm:$0xf]
        %v1866 = vld [vmem:[%s12 + $0x8] sm:$0xf]
        %v1867 = vld [vmem:[%s12 + $0xc] sm:$0xf]
        %v1868 = vld [vmem:[%s12 + $0x10] sm:$0xf]
        %v1869 = vld [vmem:[%s12 + $0x14] sm:$0xf]
        %v1870 = vld [vmem:[%s12 + $0x18] sm:$0xf]
        %v1871 = vld [vmem:[%s12 + $0x1c] sm:$0xf]
        %v1872 = vld [vmem:[%s12 + $0x20] sm:$0xf]
        %v1873 = vld [vmem:[%s12 + $0x24] sm:$0xf]
        %v1874 = vld [vmem:[%s12 + $0x28] sm:$0xf]
        %v1875 = vld [vmem:[%s12 + $0x2c] sm:$0xf]
        %v1876 = vld [vmem:[%s12 + $0x30] sm:$0xf]
        %v1877 = vld [vmem:[%s12 + $0x34] sm:$0xf]
        %v1878 = vld [vmem:[%s12 + $0x38] sm:$0xf]
        %v1879 = vld [vmem:[%s12 + $0x3c] sm:$0xf]
        %v1880 = vld [vmem:[%s13] sm:$0x1]
        %v1897 = vunpack.c.l.b16 %v1864
        %v1898 = vunpack.c.l.b16 %v1865
        %v1899 = vunpack.c.l.b16 %v1866
        %v1900 = vunpack.c.l.b16 %v1867
        %v1901 = vunpack.c.l.b16 %v1868
        %v1902 = vunpack.c.l.b16 %v1869
        %v1903 = vunpack.c.l.b16 %v1870
        %v1904 = vunpack.c.l.b16 %v1871
        %v1905 = vunpack.c.l.b16 %v1872
        %v1906 = vunpack.c.l.b16 %v1873
        %v1907 = vunpack.c.l.b16 %v1874
        %v1908 = vunpack.c.l.b16 %v1875
        %v1909 = vunpack.c.l.b16 %v1876
        %v1910 = vunpack.c.l.b16 %v1877
        %v1911 = vunpack.c.l.b16 %v1878
        %v1912 = vunpack.c.l.b16 %v1879
        %v1913 = vpack.c.b16 %v1898, %v1897
        %v1914 = vpack.c.b16 %v1900, %v1899
        %v1915 = vpack.c.b16 %v1902, %v1901
        %v1916 = vpack.c.b16 %v1904, %v1903
        %v1917 = vpack.c.b16 %v1906, %v1905
        %v1918 = vpack.c.b16 %v1908, %v1907
        %v1919 = vpack.c.b16 %v1910, %v1909
        %v1920 = vpack.c.b16 %v1912, %v1911
        %1929 = vmatprep.subr.bf16.mxu0 0
        %1930 = vmatpush1.bf16.msra.mxu0 %v1913
        %1931 = vmatprep.subr.bf16.mxu0 0
        %1932 = vmatpush1.bf16.msra.mxu0 %v1914
        %1933 = vmatprep.subr.bf16.mxu0 0
        %1934 = vmatpush1.bf16.msra.mxu0 %v1915
        %1935 = vmatprep.subr.bf16.mxu0 0
        %1936 = vmatpush1.bf16.msra.mxu0 %v1916
        %1937 = vmatprep.subr.bf16.mxu0 0
        %1938 = vmatpush1.bf16.msra.mxu0 %v1917
        %1939 = vmatprep.subr.bf16.mxu0 0
        %1940 = vmatpush1.bf16.msra.mxu0 %v1918
        %1941 = vmatprep.subr.bf16.mxu0 0
        %1942 = vmatpush1.bf16.msra.mxu0 %v1919
        %1943 = vmatprep.subr.bf16.mxu0 0
        %1944 = vmatpush1.bf16.msra.mxu0 %v1920
        %1945 = vmatprep.subr.bf16.mxu0 0
        %1946 = vmatpush1.bf16.msra.mxu0 0
        %1947 = vmatprep.subr.bf16.mxu0 0
        %1948 = vmatpush1.bf16.msra.mxu0 0
        %1949 = vmatprep.subr.bf16.mxu0 0
        %1950 = vmatpush1.bf16.msra.mxu0 0
        %1951 = vmatprep.subr.bf16.mxu0 0
        %1952 = vmatpush1.bf16.msra.mxu0 0
        %1953 = vmatprep.subr.bf16.mxu0 0
        %1954 = vmatpush1.bf16.msra.mxu0 0
        %1955 = vmatprep.subr.bf16.mxu0 0
        %1956 = vmatpush1.bf16.msra.mxu0 0
        %1957 = vmatprep.subr.bf16.mxu0 0
        %1958 = vmatpush1.bf16.msra.mxu0 0
        %1959 = vmatprep.subr.bf16.mxu0 0
        %1960 = vmatpush1.bf16.msra.mxu0 0
        %1961 = vmatprep.mubr.bf16.mxu0 0
        %1962 = vmatmul.mubr.bf16.gmra.mrb[0].mxu0 %v1863
        %v1963 = vpop.f32.mrb[0].mxu0
        %v1964 = vadd.f32 %v1880, %v1963
        %v1965 = vpop.f32.mrb[0].mxu0
        %v1966 = vpop.f32.mrb[0].mxu0
        %v1967 = vpop.f32.mrb[0].mxu0
        %1968 = vdwg.mxu0
        %1969 = vst [vmem:[%s459] sm:$0x1] %v1964
        %s1970 = sand.u32 %s335, 1
        %s1971 = scalar_lea.sflag [#allocation4], %s1970
        %s1972 = sand.u32 %s335, 1
        %s1973 = scalar_lea.vmem [#allocation3], %s1972
        // Predicated region
        $region77: #{encoder_forward.1} parent=75 // pred_check
          %p1974 = pneg %p345
        $region78: #{encoder_forward.1} parent=75 // pred_check_branch
          %1976 = sbr.rel (%p1974) target = $region80
        $region79: #{encoder_forward.1} parent=75 // pred_region
          %s1978 = ssub.s32 16, 16
          %1979 = vsyncadd %s1971, %s1978
          %s1980 = smul.addr %s28, 16
          %s1981 = scalar_lea.hbm %s14, %s1980
          %s1983 = sshll.u32 %s1973, 4
          %s1984 = int_to_ptr.vmem [resolvable:$true] %s1983
          %1986 = dma.vmem_to_hbm [thread:$0]  %s1984, 16, %s1981, %s1971
        $region80: #{encoder_forward.1} parent=75 // pred_fallthru
          _
      $region76: #{encoder_forward.1} parent=5 // pred_fallthru
        _
      %p1987 = scmp.le.s32.totalorder 2, %s23
      // Predicated region
      $region81: #{encoder_forward.1} parent=5 // pred_check
        %p1988 = pneg %p1987
      $region82: #{encoder_forward.1} parent=5 // pred_check_branch
        %1990 = sbr.rel (%p1988) target = $region84
      $region83: #{encoder_forward.1} parent=5 // pred_region
        %s1991 = ssub.s32 %s23, 2
        // Predicated region
        $region85: #{encoder_forward.1} parent=83 // pred_check
          %p1992 = pneg %p351
        $region86: #{encoder_forward.1} parent=83 // pred_check_branch
          %1994 = sbr.rel (%p1992) target = $region88
        $region87: #{encoder_forward.1} parent=83 // pred_region
          %s1995 = sand.u32 %s336, 1
          %s1996 = scalar_lea.sflag [#allocation4], %s1995
          %s1997 = sand.u32 %s336, 1
          %s1998 = scalar_lea.vmem [#allocation3], %s1997
          %1999 = dma.done %s1996, 16
        $region88: #{encoder_forward.1} parent=83 // pred_fallthru
          _
      $region84: #{encoder_forward.1} parent=5 // pred_fallthru
        _
    $region6: #{encoder_forward.1} parent=1 // loop_footer
      %s27 = sadd.s32 1, %s23
    $region7: #{encoder_forward.1} parent=1 // loop_footer_branch
      %22 = sbr.rel target = $region3
    $region8: #{encoder_forward.1} parent=1 // loop_exit
      _
    %2000 = vsyncpa [#allocation4], 1
    %s2001 = scalar_lea.sflag [#allocation4], 1
    %2002 = vsyncpa %s2001, 1

</llo_original>
